<compile_context>
chip_gen: v5e
topology: v5e:2x2
jax: 0.10.0
libtpu: 0.0.40
codegen_flags: <defaults>
</compile_context>

<pallas_src>
import functools
import numpy as np

import jax
import jax.numpy as jnp
from jax import lax
from jax.experimental import pallas as pl
from jax.experimental.pallas import tpu as pltpu

START_TAG = "<START>"
STOP_TAG = "<STOP>"
tag_to_ix = {"B": 0, "I": 1, "O": 2, START_TAG: 3, STOP_TAG: 4}

NEG = -10000.0      # CRF "impossible" score (matches the PyTorch module)
PAD_NEG = -1e9      # padding score for the padded tag lanes/sublanes


# -----------------------------------------------------------------------------
# Pallas kernel: embedding gather + fused BiLSTM + hidden2tag + Viterbi
#                forward recursion + in-kernel backtracking.
# -----------------------------------------------------------------------------
def bilstm_crf_kernel(
    sent_ref,     # (T, 1)   i32  token ids
    embwf_ref,    # (V, 8H)  f32  emb @ W_ih (fwd gate columns only, bwd cols zero)
    embwb_ref,    # (V, 8H)  f32  emb @ W_ih (bwd gate columns only, fwd cols zero)
    bbig_ref,     # (1, 8H)  f32  combined biases (both directions, gate-major)
    whh_ref,      # (2H, 8H) bf16 block-diagonal recurrent weights (gate-major)
    h0_ref,       # (1, 2H)  f32  [h0_fwd | h0_bwd]
    c0_ref,       # (1, 2H)  f32  [c0_fwd | c0_bwd]
    wtagf_ref,    # (H, P)   f32  hidden2tag (fwd half), tag lanes zero-padded
    wtagb_ref,    # (H, P)   f32  hidden2tag (bwd half)
    btag_ref,     # (1, P)   f32
    transt_ref,   # (R, P)   f32  transitions^T padded (prev on sublanes, next on lanes)
    tstop_ref,    # (1, P)   f32  transitions[STOP, :] padded
    # outputs
    feats_ref,    # (T, P)   f32  emission scores (first TS lanes valid)
    path_ref,     # (T, 1)   i32  decoded tag sequence
    score_ref,    # (1, 1)   f32  path score
    start_ref,    # (1, 1)   i32  backpointer at t=0 (must equal START)
    # scratch
    xproj_ref,    # (T, 8H)  f32  precomputed input projections
    hs_ref,       # (T, 2H)  f32  packed hidden states (loop order)
    bptr_ref,     # (T, P)   f32  Viterbi backpointers (as f32 indices)
    poh_ref,      # (T, P)   f32  decoded-path one-hot rows
    *, start_idx, vocab,
):
    T = sent_ref.shape[0]
    G = embwf_ref.shape[1]        # 8H
    H2 = h0_ref.shape[1]          # 2H
    H = H2 // 2
    R = transt_ref.shape[0]       # padded prev sublanes (8)
    P = transt_ref.shape[1]       # padded next lanes (128)
    f32 = jnp.float32

    # ---- embedding gather + input projection (one-hot matmul, fully fused) ----
    onehot = (sent_ref[...] ==
              lax.broadcasted_iota(jnp.int32, (T, vocab), 1)).astype(f32)
    rev = ((lax.broadcasted_iota(jnp.int32, (T, T), 0) +
            lax.broadcasted_iota(jnp.int32, (T, T), 1)) == T - 1).astype(f32)
    q_f = jnp.dot(onehot, embwf_ref[...], preferred_element_type=f32)   # (T, 8H)
    q_b = jnp.dot(onehot, embwb_ref[...], preferred_element_type=f32)   # (T, 8H)
    # backward direction consumes time-reversed inputs: reverse its rows once here
    xproj_ref[...] = (q_f + jnp.dot(rev, q_b, preferred_element_type=f32)
                      + bbig_ref[...])

    # ---- fused fwd+bwd LSTM recurrence (fully unrolled, bf16 MXU operands) ----
    whh = whh_ref[...]            # bf16 (2H, 8H)
    h = h0_ref[...]               # f32 (1, 2H)
    c = c0_ref[...]
    for t in range(T):
        xp = xproj_ref[pl.ds(t, 1), :]                                   # (1, 8H)
        gates = xp + jnp.dot(h.astype(jnp.bfloat16), whh,
                             preferred_element_type=f32)
        sg = pl.reciprocal(1.0 + jnp.exp(-gates), approx=True)           # sigmoid
        th = jnp.tanh(gates)
        i_g = sg[:, 0 * H2:1 * H2]
        f_g = sg[:, 1 * H2:2 * H2]
        g_g = th[:, 2 * H2:3 * H2]
        o_g = sg[:, 3 * H2:4 * H2]
        c = f_g * c + i_g * g_g
        h = o_g * jnp.tanh(c)
        hs_ref[pl.ds(t, 1), :] = h        # natural order; bwd half re-reversed below

    # ---- hidden2tag (bwd half time-reversal fixed once, off the serial chain) --
    hs = hs_ref[...]
    hb_rev = jnp.dot(rev, hs[:, H:H2], preferred_element_type=f32)
    feats = (jnp.dot(hs[:, 0:H], wtagf_ref[...], preferred_element_type=f32)
             + jnp.dot(hb_rev, wtagb_ref[...], preferred_element_type=f32)
             + btag_ref[...])
    feats_ref[...] = feats

    # ---- Viterbi forward recursion (prev on sublanes, next on lanes) -----------
    transt = transt_ref[...]                                             # (R, P)
    prev_iota_f = lax.broadcasted_iota(jnp.int32, (R, P), 0).astype(f32)
    eye = (lax.broadcasted_iota(jnp.int32, (R, P), 0) ==
           lax.broadcasted_iota(jnp.int32, (R, P), 1))
    col_iota = lax.broadcasted_iota(jnp.int32, (R, 1), 0)
    fv_col = jnp.where(col_iota == start_idx, 0.0, NEG).astype(f32)      # (R, 1)
    lane_iota = lax.broadcasted_iota(jnp.int32, (1, P), 1).astype(f32)   # (1, P)

    fv_row = None
    for t in range(T):
        scores = fv_col + transt                                         # (R, P)
        vmax = jnp.max(scores, axis=0, keepdims=True)                    # (1, P)
        best = jnp.min(jnp.where(scores == vmax, prev_iota_f, float(R)),
                       axis=0, keepdims=True)                            # (1, P)
        bptr_ref[pl.ds(t, 1), :] = best
        fv_row = vmax + feats_ref[pl.ds(t, 1), :]
        if t + 1 < T:
            # single row -> column conversion for the next step
            fv_col = jnp.sum(jnp.where(eye, fv_row, 0.0), axis=1, keepdims=True)

    term = fv_row + tstop_ref[...]                                       # (1, P)
    tmax = jnp.max(term, axis=1, keepdims=True)                          # (1, 1)
    best_last = jnp.min(jnp.where(term == tmax, lane_iota, float(P)),
                        axis=1, keepdims=True)                           # (1, 1)
    score_ref[...] = tmax

    # ---- Viterbi backtracking, fully in-kernel (vectorized one-hot select) -----
    cur = (lane_iota == best_last).astype(f32)                           # (1, P)
    bsel = None
    for t in range(T - 1, -1, -1):
        poh_ref[pl.ds(t, 1), :] = cur
        bsel = jnp.sum(cur * bptr_ref[pl.ds(t, 1), :], axis=1, keepdims=True)
        cur = (lane_iota == bsel).astype(f32)
    start_ref[...] = bsel.astype(jnp.int32)          # backpointer at t=0 == START
    path_idx = jnp.sum(poh_ref[...] * lane_iota, axis=1, keepdims=True)  # (T, 1)
    path_ref[...] = path_idx.astype(jnp.int32)


# -----------------------------------------------------------------------------
# Parameters (deterministic, mimicking BiLSTM_CRF.__init__ shapes)
# -----------------------------------------------------------------------------
def make_params(key, vocab_size, embedding_dim, hidden_dim, tagset_size):
    H = hidden_dim // 2
    ks = jax.random.split(key, 16)
    s = 0.1
    p = {
        "emb": jax.random.normal(ks[0], (vocab_size, embedding_dim), jnp.float32),
        "w_ih_f": jax.random.normal(ks[1], (4 * H, embedding_dim), jnp.float32) * s,
        "w_hh_f": jax.random.normal(ks[2], (4 * H, H), jnp.float32) * s,
        "b_ih_f": jax.random.normal(ks[3], (4 * H,), jnp.float32) * s,
        "b_hh_f": jax.random.normal(ks[4], (4 * H,), jnp.float32) * s,
        "w_ih_b": jax.random.normal(ks[5], (4 * H, embedding_dim), jnp.float32) * s,
        "w_hh_b": jax.random.normal(ks[6], (4 * H, H), jnp.float32) * s,
        "b_ih_b": jax.random.normal(ks[7], (4 * H,), jnp.float32) * s,
        "b_hh_b": jax.random.normal(ks[8], (4 * H,), jnp.float32) * s,
        "w_tag": jax.random.normal(ks[9], (tagset_size, hidden_dim), jnp.float32) * s,
        "b_tag": jax.random.normal(ks[10], (tagset_size,), jnp.float32) * s,
        "h0": jax.random.normal(ks[11], (2, 1, H), jnp.float32),
        "c0": jax.random.normal(ks[12], (2, 1, H), jnp.float32),
    }
    trans = jax.random.normal(ks[13], (tagset_size, tagset_size), jnp.float32)
    trans = trans.at[tag_to_ix[START_TAG], :].set(NEG)
    trans = trans.at[:, tag_to_ix[STOP_TAG]].set(NEG)
    p["transitions"] = trans
    return p


# -----------------------------------------------------------------------------
# One-time weight repacking (hoisted out of the per-call hot path).
# -----------------------------------------------------------------------------
def pack_params(p, hidden_dim, prev_pad=8, next_pad=128):
    H = hidden_dim // 2
    H2 = 2 * H
    E = p["emb"].shape[1]
    TS = p["transitions"].shape[0]

    wih_f_t, wih_b_t = p["w_ih_f"].T, p["w_ih_b"].T       # (E, 4H)
    whh_f_t, whh_b_t = p["w_hh_f"].T, p["w_hh_b"].T       # (H, 4H)
    bf = p["b_ih_f"] + p["b_hh_f"]
    bb = p["b_ih_b"] + p["b_hh_b"]

    # gate-major layout: [i_f,i_b | f_f,f_b | g_f,g_b | o_f,o_b], each block H wide
    wx_f = jnp.zeros((E, 8 * H), jnp.float32)
    wx_b = jnp.zeros((E, 8 * H), jnp.float32)
    whh = jnp.zeros((H2, 8 * H), jnp.float32)
    bbig = jnp.zeros((8 * H,), jnp.float32)
    for g in range(4):
        fcol = slice(g * H2, g * H2 + H)
        bcol = slice(g * H2 + H, (g + 1) * H2)
        gsl = slice(g * H, (g + 1) * H)
        wx_f = wx_f.at[:, fcol].set(wih_f_t[:, gsl])
        wx_b = wx_b.at[:, bcol].set(wih_b_t[:, gsl])
        whh = whh.at[0:H, fcol].set(whh_f_t[:, gsl])
        whh = whh.at[H:H2, bcol].set(whh_b_t[:, gsl])
        bbig = bbig.at[fcol].set(bf[gsl])
        bbig = bbig.at[bcol].set(bb[gsl])

    # fold the embedding table through the input projection (gather == one-hot matmul)
    embwf = jnp.dot(p["emb"], wx_f)                        # (V, 8H)
    embwb = jnp.dot(p["emb"], wx_b)                        # (V, 8H)

    wtag_t = p["w_tag"].T                                  # (2H, TS)
    wtagf = jnp.zeros((H, next_pad), jnp.float32).at[:, :TS].set(wtag_t[:H])
    wtagb = jnp.zeros((H, next_pad), jnp.float32).at[:, :TS].set(wtag_t[H:])
    btag = jnp.zeros((1, next_pad), jnp.float32).at[0, :TS].set(p["b_tag"])
    transt = jnp.full((prev_pad, next_pad), PAD_NEG, jnp.float32)
    transt = transt.at[:TS, :TS].set(p["transitions"].T)   # (prev, next)
    tstop = jnp.full((1, next_pad), PAD_NEG, jnp.float32)
    tstop = tstop.at[0, :TS].set(p["transitions"][tag_to_ix[STOP_TAG]])

    packed = {
        "embwf": embwf, "embwb": embwb, "bbig": bbig[None, :],
        "whh": whh.astype(jnp.bfloat16),                   # bf16 MXU operand
        "h0": jnp.concatenate([p["h0"][0], p["h0"][1]], axis=1),
        "c0": jnp.concatenate([p["c0"][0], p["c0"][1]], axis=1),
        "wtagf": wtagf, "wtagb": wtagb, "btag": btag,
        "transt": transt, "tstop": tstop,
    }
    return jax.tree_util.tree_map(jnp.asarray, packed)


# -----------------------------------------------------------------------------
# Jitted wrapper: a single pallas_call (whole forward pass in one kernel).
# -----------------------------------------------------------------------------
@jax.jit
def _forward_impl(sentence, packed):
    T = sentence.shape[0]
    V, G = packed["embwf"].shape
    H2 = packed["h0"].shape[1]
    R, P = packed["transt"].shape

    sent_col = sentence.astype(jnp.int32).reshape(T, 1)
    kernel = functools.partial(bilstm_crf_kernel,
                               start_idx=tag_to_ix[START_TAG], vocab=V)
    vmem = pl.BlockSpec(memory_space=pltpu.MemorySpace.VMEM)
    inputs = (sent_col, packed["embwf"], packed["embwb"], packed["bbig"],
              packed["whh"], packed["h0"], packed["c0"], packed["wtagf"],
              packed["wtagb"], packed["btag"], packed["transt"], packed["tstop"])

    feats, path, score, start = pl.pallas_call(
        kernel,
        out_shape=(
            jax.ShapeDtypeStruct((T, P), jnp.float32),   # emission feats (padded)
            jax.ShapeDtypeStruct((T, 1), jnp.int32),     # decoded path
            jax.ShapeDtypeStruct((1, 1), jnp.float32),   # path score
            jax.ShapeDtypeStruct((1, 1), jnp.int32),     # start-tag check
        ),
        in_specs=[vmem] * len(inputs),
        out_specs=(vmem, vmem, vmem, vmem),
        scratch_shapes=[
            pltpu.VMEM((T, G), jnp.float32),    # input projections
            pltpu.VMEM((T, H2), jnp.float32),   # packed hidden states
            pltpu.VMEM((T, P), jnp.float32),    # backpointers (f32 indices)
            pltpu.VMEM((T, P), jnp.float32),    # path one-hots
        ],
    )(*inputs)
    return feats, path, score, start


def bilstm_crf_forward(sentence, packed):
    feats, path, score, start = _forward_impl(sentence, packed)
    jax.block_until_ready((feats, path, score, start))
    assert int(start[0, 0]) == tag_to_ix[START_TAG]
    ts = len(tag_to_ix)
    return (float(score[0, 0]),
            [int(t) for t in np.asarray(path)[:, 0]],
            np.asarray(feats)[:, :ts])


# -----------------------------------------------------------------------------
# Pure-numpy references.
# -----------------------------------------------------------------------------
def reference_forward(sentence, p, hidden_dim):
    H = hidden_dim // 2

    def sig(x):
        return 1.0 / (1.0 + np.exp(-x))

    emb = np.asarray(p["emb"], np.float64)[np.asarray(sentence)]

    def run_dir(xs, wih, whh, bias, h0, c0):
        h, c = h0.copy(), c0.copy()
        outs = []
        for x in xs:
            g = wih @ x + whh @ h + bias
            i, f = sig(g[0:H]), sig(g[H:2 * H])
            gg, o = np.tanh(g[2 * H:3 * H]), sig(g[3 * H:4 * H])
            c = f * c + i * gg
            h = o * np.tanh(c)
            outs.append(h)
        return outs

    hf = run_dir(emb, np.asarray(p["w_ih_f"], np.float64),
                 np.asarray(p["w_hh_f"], np.float64),
                 np.asarray(p["b_ih_f"] + p["b_hh_f"], np.float64),
                 np.asarray(p["h0"], np.float64)[0, 0],
                 np.asarray(p["c0"], np.float64)[0, 0])
    hb = run_dir(emb[::-1], np.asarray(p["w_ih_b"], np.float64),
                 np.asarray(p["w_hh_b"], np.float64),
                 np.asarray(p["b_ih_b"] + p["b_hh_b"], np.float64),
                 np.asarray(p["h0"], np.float64)[1, 0],
                 np.asarray(p["c0"], np.float64)[1, 0])
    hb = hb[::-1]
    lstm_out = np.concatenate([np.stack(hf), np.stack(hb)], axis=1)
    feats = lstm_out @ np.asarray(p["w_tag"], np.float64).T + np.asarray(p["b_tag"])
    return feats


def viterbi_np(feats, transitions):
    """Exact float32 Viterbi decode (same math as the module's _viterbi_decode)."""
    feats = np.asarray(feats, np.float32)
    trans = np.asarray(transitions, np.float32)
    ts = trans.shape[0]
    fv = np.full(ts, NEG, np.float32)
    fv[tag_to_ix[START_TAG]] = 0.0
    bptrs = []
    for feat in feats:
        scores = fv[None, :] + trans               # [next, prev]
        bptrs.append(scores.argmax(axis=1))
        fv = (scores.max(axis=1) + feat).astype(np.float32)
    term = fv + trans[tag_to_ix[STOP_TAG]]
    best = int(term.argmax())
    score = float(term[best])
    path = [best]
    for bp in reversed(bptrs):
        best = int(bp[best])
        path.append(best)
    assert path.pop() == tag_to_ix[START_TAG]
    path.reverse()
    return score, path


if __name__ == "__main__":
    VOCAB, EMBED, HIDDEN, T = 10, 16, 32, 8
    TS = len(tag_to_ix)

    key = jax.random.PRNGKey(0)
    kp, ks = jax.random.split(key)
    params = make_params(kp, VOCAB, EMBED, HIDDEN, TS)
    packed = pack_params(params, HIDDEN)           # one-time repack, off hot path
    sentence = jax.random.randint(ks, (T,), 0, VOCAB, dtype=jnp.int32)

    score, path, feats = bilstm_crf_forward(sentence, packed)

    # LSTM numerics (bf16 MXU + approx-sigmoid): compare emissions with tolerance.
    ref_feats = reference_forward(sentence, params, HIDDEN)
    assert np.allclose(feats, ref_feats, rtol=5e-2, atol=5e-2), (feats, ref_feats)

    # Viterbi logic: must exactly reproduce a float32 decode on the kernel's feats.
    chk_score, chk_path = viterbi_np(feats, params["transitions"])
    assert path == chk_path, (path, chk_path)
    assert abs(score - chk_score) < 1e-3, (score, chk_score)

    # End-to-end sanity versus the full-precision reference decode.
    ref_score, _ = viterbi_np(ref_feats, params["transitions"])
    assert abs(score - ref_score) < 0.5, (score, ref_score)

    print("KERNEL_OK")
</pallas_src>

<mosaic_0001>
module attributes {stable_mosaic.version = 11 : i64} {
  func.func @bilstm_crf_kernel(%arg0: memref<8x1xi32, #tpu.memory_space<vmem>>, %arg1: memref<10x128xf32, #tpu.memory_space<vmem>>, %arg2: memref<10x128xf32, #tpu.memory_space<vmem>>, %arg3: memref<1x128xf32, #tpu.memory_space<vmem>>, %arg4: memref<32x128xbf16, #tpu.memory_space<vmem>>, %arg5: memref<1x32xf32, #tpu.memory_space<vmem>>, %arg6: memref<1x32xf32, #tpu.memory_space<vmem>>, %arg7: memref<16x128xf32, #tpu.memory_space<vmem>>, %arg8: memref<16x128xf32, #tpu.memory_space<vmem>>, %arg9: memref<1x128xf32, #tpu.memory_space<vmem>>, %arg10: memref<8x128xf32, #tpu.memory_space<vmem>>, %arg11: memref<1x128xf32, #tpu.memory_space<vmem>>, %arg12: memref<8x128xf32, #tpu.memory_space<vmem>>, %arg13: memref<8x1xi32, #tpu.memory_space<vmem>>, %arg14: memref<1x1xf32, #tpu.memory_space<vmem>>, %arg15: memref<1x1xi32, #tpu.memory_space<vmem>>, %arg16: memref<8x128xf32, #tpu.memory_space<vmem>>, %arg17: memref<8x32xf32, #tpu.memory_space<vmem>>, %arg18: memref<8x128xf32, #tpu.memory_space<vmem>>, %arg19: memref<8x128xf32, #tpu.memory_space<vmem>>) attributes {dimension_semantics = [], scalar_prefetch = 0 : i64, scratch_operands = 4 : i64, tpu.core_type = #tpu.core_type<tc>} {
    %c0 = arith.constant 0 : index
    %c0_0 = arith.constant 0 : index
    %0 = vector.load %arg0[%c0, %c0_0] : memref<8x1xi32, #tpu.memory_space<vmem>>, vector<8x1xi32>
    %1 = tpu.iota {dimensions = array<i32: 1>} : vector<8x10xi32>
    %2 = vector.broadcast %0 : vector<8x1xi32> to vector<8x10xi32>
    %3 = arith.cmpi eq, %2, %1 : vector<8x10xi32>
    %4 = arith.extui %3 : vector<8x10xi1> to vector<8x10xi32>
    %5 = arith.sitofp %4 : vector<8x10xi32> to vector<8x10xf32>
    %6 = tpu.iota {dimensions = array<i32: 0>} : vector<8x8xi32>
    %7 = tpu.iota {dimensions = array<i32: 1>} : vector<8x8xi32>
    %8 = arith.addi %6, %7 : vector<8x8xi32>
    %c7_i32 = arith.constant 7 : i32
    %9 = vector.broadcast %c7_i32 : i32 to vector<8x8xi32>
    %10 = arith.cmpi eq, %8, %9 : vector<8x8xi32>
    %11 = arith.extui %10 : vector<8x8xi1> to vector<8x8xi32>
    %12 = arith.sitofp %11 : vector<8x8xi32> to vector<8x8xf32>
    %c0_1 = arith.constant 0 : index
    %c0_2 = arith.constant 0 : index
    %13 = vector.load %arg1[%c0_1, %c0_2] : memref<10x128xf32, #tpu.memory_space<vmem>>, vector<10x128xf32>
    %cst = arith.constant dense<0.000000e+00> : vector<8x128xf32>
    %14 = tpu.matmul %5, %13, %cst {dimension_numbers = #tpu.dot_dimension_numbers<[1], [0], [0], [1], [0, 0, 1, 1], [], []>} : vector<8x10xf32>, vector<10x128xf32>, vector<8x128xf32> -> vector<8x128xf32>
    %c0_3 = arith.constant 0 : index
    %c0_4 = arith.constant 0 : index
    %15 = vector.load %arg2[%c0_3, %c0_4] : memref<10x128xf32, #tpu.memory_space<vmem>>, vector<10x128xf32>
    %cst_5 = arith.constant dense<0.000000e+00> : vector<8x128xf32>
    %16 = tpu.matmul %5, %15, %cst_5 {dimension_numbers = #tpu.dot_dimension_numbers<[1], [0], [0], [1], [0, 0, 1, 1], [], []>} : vector<8x10xf32>, vector<10x128xf32>, vector<8x128xf32> -> vector<8x128xf32>
    %cst_6 = arith.constant dense<0.000000e+00> : vector<8x128xf32>
    %17 = tpu.matmul %12, %16, %cst_6 {dimension_numbers = #tpu.dot_dimension_numbers<[1], [0], [0], [1], [0, 0, 1, 1], [], []>} : vector<8x8xf32>, vector<8x128xf32>, vector<8x128xf32> -> vector<8x128xf32>
    %18 = arith.addf %14, %17 : vector<8x128xf32>
    %c0_7 = arith.constant 0 : index
    %c0_8 = arith.constant 0 : index
    %19 = vector.load %arg3[%c0_7, %c0_8] : memref<1x128xf32, #tpu.memory_space<vmem>>, vector<1x128xf32>
    %20 = vector.broadcast %19 : vector<1x128xf32> to vector<8x128xf32>
    %21 = arith.addf %18, %20 : vector<8x128xf32>
    %c0_9 = arith.constant 0 : index
    %c0_10 = arith.constant 0 : index
    %22 = vector.load %arg16[%c0_9, %c0_10] : memref<8x128xf32, #tpu.memory_space<vmem>>, vector<8x128xf32>
    tpu.vector_store %arg16[%c0_9, %c0_10], %21 {strides = array<i32>} : memref<8x128xf32, #tpu.memory_space<vmem>>, vector<8x128xf32>,
    %c0_11 = arith.constant 0 : index
    %c0_12 = arith.constant 0 : index
    %23 = vector.load %arg4[%c0_11, %c0_12] : memref<32x128xbf16, #tpu.memory_space<vmem>>, vector<32x128xbf16>
    %c0_13 = arith.constant 0 : index
    %c0_14 = arith.constant 0 : index
    %24 = vector.load %arg5[%c0_13, %c0_14] : memref<1x32xf32, #tpu.memory_space<vmem>>, vector<1x32xf32>
    %c0_15 = arith.constant 0 : index
    %c0_16 = arith.constant 0 : index
    %25 = vector.load %arg6[%c0_15, %c0_16] : memref<1x32xf32, #tpu.memory_space<vmem>>, vector<1x32xf32>
    %c0_17 = arith.constant 0 : index
    %c0_18 = arith.constant 0 : index
    %26 = vector.load %arg16[%c0_17, %c0_18] : memref<8x128xf32, #tpu.memory_space<vmem>>, vector<1x128xf32>
    %27 = arith.truncf %24 : vector<1x32xf32> to vector<1x32xbf16>
    %cst_19 = arith.constant dense<0.000000e+00> : vector<1x128xf32>
    %28 = tpu.matmul %27, %23, %cst_19 {dimension_numbers = #tpu.dot_dimension_numbers<[1], [0], [0], [1], [0, 0, 1, 1], [], []>} : vector<1x32xbf16>, vector<32x128xbf16>, vector<1x128xf32> -> vector<1x128xf32>
    %29 = arith.addf %26, %28 : vector<1x128xf32>
    %cst_20 = arith.constant 0.000000e+00 : f32
    %30 = vector.broadcast %cst_20 : f32 to vector<1x128xf32>
    %31 = arith.subf %30, %29 : vector<1x128xf32>
    %32 = math.exp %31 : vector<1x128xf32>
    %cst_21 = arith.constant 1.000000e+00 : f32
    %33 = vector.broadcast %cst_21 : f32 to vector<1x128xf32>
    %34 = arith.addf %33, %32 : vector<1x128xf32>
    %35 = tpu.reciprocal %34 {approx = true} : vector<1x128xf32> -> vector<1x128xf32>
    %36 = math.tanh %29 : vector<1x128xf32>
    %37 = vector.extract_strided_slice %35 {offsets = [0, 0], sizes = [1, 32], strides = [1, 1]} : vector<1x128xf32> to vector<1x32xf32>
    %38 = vector.extract_strided_slice %35 {offsets = [0, 32], sizes = [1, 32], strides = [1, 1]} : vector<1x128xf32> to vector<1x32xf32>
    %39 = vector.extract_strided_slice %36 {offsets = [0, 64], sizes = [1, 32], strides = [1, 1]} : vector<1x128xf32> to vector<1x32xf32>
    %40 = vector.extract_strided_slice %35 {offsets = [0, 96], sizes = [1, 32], strides = [1, 1]} : vector<1x128xf32> to vector<1x32xf32>
    %41 = arith.mulf %38, %25 : vector<1x32xf32>
    %42 = arith.mulf %37, %39 : vector<1x32xf32>
    %43 = arith.addf %41, %42 : vector<1x32xf32>
    %44 = math.tanh %43 : vector<1x32xf32>
    %45 = arith.mulf %40, %44 : vector<1x32xf32>
    %c0_22 = arith.constant 0 : index
    %c0_23 = arith.constant 0 : index
    %46 = vector.load %arg17[%c0_22, %c0_23] : memref<8x32xf32, #tpu.memory_space<vmem>>, vector<1x32xf32>
    tpu.vector_store %arg17[%c0_22, %c0_23], %45 {strides = array<i32>} : memref<8x32xf32, #tpu.memory_space<vmem>>, vector<1x32xf32>,
    %c1 = arith.constant 1 : index
    %c0_24 = arith.constant 0 : index
    %47 = vector.load %arg16[%c1, %c0_24] : memref<8x128xf32, #tpu.memory_space<vmem>>, vector<1x128xf32>
    %48 = arith.truncf %45 : vector<1x32xf32> to vector<1x32xbf16>
    %cst_25 = arith.constant dense<0.000000e+00> : vector<1x128xf32>
    %49 = tpu.matmul %48, %23, %cst_25 {dimension_numbers = #tpu.dot_dimension_numbers<[1], [0], [0], [1], [0, 0, 1, 1], [], []>} : vector<1x32xbf16>, vector<32x128xbf16>, vector<1x128xf32> -> vector<1x128xf32>
    %50 = arith.addf %47, %49 : vector<1x128xf32>
    %cst_26 = arith.constant 0.000000e+00 : f32
    %51 = vector.broadcast %cst_26 : f32 to vector<1x128xf32>
    %52 = arith.subf %51, %50 : vector<1x128xf32>
    %53 = math.exp %52 : vector<1x128xf32>
    %cst_27 = arith.constant 1.000000e+00 : f32
    %54 = vector.broadcast %cst_27 : f32 to vector<1x128xf32>
    %55 = arith.addf %54, %53 : vector<1x128xf32>
    %56 = tpu.reciprocal %55 {approx = true} : vector<1x128xf32> -> vector<1x128xf32>
    %57 = math.tanh %50 : vector<1x128xf32>
    %58 = vector.extract_strided_slice %56 {offsets = [0, 0], sizes = [1, 32], strides = [1, 1]} : vector<1x128xf32> to vector<1x32xf32>
    %59 = vector.extract_strided_slice %56 {offsets = [0, 32], sizes = [1, 32], strides = [1, 1]} : vector<1x128xf32> to vector<1x32xf32>
    %60 = vector.extract_strided_slice %57 {offsets = [0, 64], sizes = [1, 32], strides = [1, 1]} : vector<1x128xf32> to vector<1x32xf32>
    %61 = vector.extract_strided_slice %56 {offsets = [0, 96], sizes = [1, 32], strides = [1, 1]} : vector<1x128xf32> to vector<1x32xf32>
    %62 = arith.mulf %59, %43 : vector<1x32xf32>
    %63 = arith.mulf %58, %60 : vector<1x32xf32>
    %64 = arith.addf %62, %63 : vector<1x32xf32>
    %65 = math.tanh %64 : vector<1x32xf32>
    %66 = arith.mulf %61, %65 : vector<1x32xf32>
    %c1_28 = arith.constant 1 : index
    %c0_29 = arith.constant 0 : index
    %67 = vector.load %arg17[%c1_28, %c0_29] : memref<8x32xf32, #tpu.memory_space<vmem>>, vector<1x32xf32>
    tpu.vector_store %arg17[%c1_28, %c0_29], %66 {strides = array<i32>} : memref<8x32xf32, #tpu.memory_space<vmem>>, vector<1x32xf32>,
    %c2 = arith.constant 2 : index
    %c0_30 = arith.constant 0 : index
    %68 = vector.load %arg16[%c2, %c0_30] : memref<8x128xf32, #tpu.memory_space<vmem>>, vector<1x128xf32>
    %69 = arith.truncf %66 : vector<1x32xf32> to vector<1x32xbf16>
    %cst_31 = arith.constant dense<0.000000e+00> : vector<1x128xf32>
    %70 = tpu.matmul %69, %23, %cst_31 {dimension_numbers = #tpu.dot_dimension_numbers<[1], [0], [0], [1], [0, 0, 1, 1], [], []>} : vector<1x32xbf16>, vector<32x128xbf16>, vector<1x128xf32> -> vector<1x128xf32>
    %71 = arith.addf %68, %70 : vector<1x128xf32>
    %cst_32 = arith.constant 0.000000e+00 : f32
    %72 = vector.broadcast %cst_32 : f32 to vector<1x128xf32>
    %73 = arith.subf %72, %71 : vector<1x128xf32>
    %74 = math.exp %73 : vector<1x128xf32>
    %cst_33 = arith.constant 1.000000e+00 : f32
    %75 = vector.broadcast %cst_33 : f32 to vector<1x128xf32>
    %76 = arith.addf %75, %74 : vector<1x128xf32>
    %77 = tpu.reciprocal %76 {approx = true} : vector<1x128xf32> -> vector<1x128xf32>
    %78 = math.tanh %71 : vector<1x128xf32>
    %79 = vector.extract_strided_slice %77 {offsets = [0, 0], sizes = [1, 32], strides = [1, 1]} : vector<1x128xf32> to vector<1x32xf32>
    %80 = vector.extract_strided_slice %77 {offsets = [0, 32], sizes = [1, 32], strides = [1, 1]} : vector<1x128xf32> to vector<1x32xf32>
    %81 = vector.extract_strided_slice %78 {offsets = [0, 64], sizes = [1, 32], strides = [1, 1]} : vector<1x128xf32> to vector<1x32xf32>
    %82 = vector.extract_strided_slice %77 {offsets = [0, 96], sizes = [1, 32], strides = [1, 1]} : vector<1x128xf32> to vector<1x32xf32>
    %83 = arith.mulf %80, %64 : vector<1x32xf32>
    %84 = arith.mulf %79, %81 : vector<1x32xf32>
    %85 = arith.addf %83, %84 : vector<1x32xf32>
    %86 = math.tanh %85 : vector<1x32xf32>
    %87 = arith.mulf %82, %86 : vector<1x32xf32>
    %c2_34 = arith.constant 2 : index
    %c0_35 = arith.constant 0 : index
    %88 = vector.load %arg17[%c2_34, %c0_35] : memref<8x32xf32, #tpu.memory_space<vmem>>, vector<1x32xf32>
    tpu.vector_store %arg17[%c2_34, %c0_35], %87 {strides = array<i32>} : memref<8x32xf32, #tpu.memory_space<vmem>>, vector<1x32xf32>,
    %c3 = arith.constant 3 : index
    %c0_36 = arith.constant 0 : index
    %89 = vector.load %arg16[%c3, %c0_36] : memref<8x128xf32, #tpu.memory_space<vmem>>, vector<1x128xf32>
    %90 = arith.truncf %87 : vector<1x32xf32> to vector<1x32xbf16>
    %cst_37 = arith.constant dense<0.000000e+00> : vector<1x128xf32>
    %91 = tpu.matmul %90, %23, %cst_37 {dimension_numbers = #tpu.dot_dimension_numbers<[1], [0], [0], [1], [0, 0, 1, 1], [], []>} : vector<1x32xbf16>, vector<32x128xbf16>, vector<1x128xf32> -> vector<1x128xf32>
    %92 = arith.addf %89, %91 : vector<1x128xf32>
    %cst_38 = arith.constant 0.000000e+00 : f32
    %93 = vector.broadcast %cst_38 : f32 to vector<1x128xf32>
    %94 = arith.subf %93, %92 : vector<1x128xf32>
    %95 = math.exp %94 : vector<1x128xf32>
    %cst_39 = arith.constant 1.000000e+00 : f32
    %96 = vector.broadcast %cst_39 : f32 to vector<1x128xf32>
    %97 = arith.addf %96, %95 : vector<1x128xf32>
    %98 = tpu.reciprocal %97 {approx = true} : vector<1x128xf32> -> vector<1x128xf32>
    %99 = math.tanh %92 : vector<1x128xf32>
    %100 = vector.extract_strided_slice %98 {offsets = [0, 0], sizes = [1, 32], strides = [1, 1]} : vector<1x128xf32> to vector<1x32xf32>
    %101 = vector.extract_strided_slice %98 {offsets = [0, 32], sizes = [1, 32], strides = [1, 1]} : vector<1x128xf32> to vector<1x32xf32>
    %102 = vector.extract_strided_slice %99 {offsets = [0, 64], sizes = [1, 32], strides = [1, 1]} : vector<1x128xf32> to vector<1x32xf32>
    %103 = vector.extract_strided_slice %98 {offsets = [0, 96], sizes = [1, 32], strides = [1, 1]} : vector<1x128xf32> to vector<1x32xf32>
    %104 = arith.mulf %101, %85 : vector<1x32xf32>
    %105 = arith.mulf %100, %102 : vector<1x32xf32>
    %106 = arith.addf %104, %105 : vector<1x32xf32>
    %107 = math.tanh %106 : vector<1x32xf32>
    %108 = arith.mulf %103, %107 : vector<1x32xf32>
    %c3_40 = arith.constant 3 : index
    %c0_41 = arith.constant 0 : index
    %109 = vector.load %arg17[%c3_40, %c0_41] : memref<8x32xf32, #tpu.memory_space<vmem>>, vector<1x32xf32>
    tpu.vector_store %arg17[%c3_40, %c0_41], %108 {strides = array<i32>} : memref<8x32xf32, #tpu.memory_space<vmem>>, vector<1x32xf32>,
    %c4 = arith.constant 4 : index
    %c0_42 = arith.constant 0 : index
    %110 = vector.load %arg16[%c4, %c0_42] : memref<8x128xf32, #tpu.memory_space<vmem>>, vector<1x128xf32>
    %111 = arith.truncf %108 : vector<1x32xf32> to vector<1x32xbf16>
    %cst_43 = arith.constant dense<0.000000e+00> : vector<1x128xf32>
    %112 = tpu.matmul %111, %23, %cst_43 {dimension_numbers = #tpu.dot_dimension_numbers<[1], [0], [0], [1], [0, 0, 1, 1], [], []>} : vector<1x32xbf16>, vector<32x128xbf16>, vector<1x128xf32> -> vector<1x128xf32>
    %113 = arith.addf %110, %112 : vector<1x128xf32>
    %cst_44 = arith.constant 0.000000e+00 : f32
    %114 = vector.broadcast %cst_44 : f32 to vector<1x128xf32>
    %115 = arith.subf %114, %113 : vector<1x128xf32>
    %116 = math.exp %115 : vector<1x128xf32>
    %cst_45 = arith.constant 1.000000e+00 : f32
    %117 = vector.broadcast %cst_45 : f32 to vector<1x128xf32>
    %118 = arith.addf %117, %116 : vector<1x128xf32>
    %119 = tpu.reciprocal %118 {approx = true} : vector<1x128xf32> -> vector<1x128xf32>
    %120 = math.tanh %113 : vector<1x128xf32>
    %121 = vector.extract_strided_slice %119 {offsets = [0, 0], sizes = [1, 32], strides = [1, 1]} : vector<1x128xf32> to vector<1x32xf32>
    %122 = vector.extract_strided_slice %119 {offsets = [0, 32], sizes = [1, 32], strides = [1, 1]} : vector<1x128xf32> to vector<1x32xf32>
    %123 = vector.extract_strided_slice %120 {offsets = [0, 64], sizes = [1, 32], strides = [1, 1]} : vector<1x128xf32> to vector<1x32xf32>
    %124 = vector.extract_strided_slice %119 {offsets = [0, 96], sizes = [1, 32], strides = [1, 1]} : vector<1x128xf32> to vector<1x32xf32>
    %125 = arith.mulf %122, %106 : vector<1x32xf32>
    %126 = arith.mulf %121, %123 : vector<1x32xf32>
    %127 = arith.addf %125, %126 : vector<1x32xf32>
    %128 = math.tanh %127 : vector<1x32xf32>
    %129 = arith.mulf %124, %128 : vector<1x32xf32>
    %c4_46 = arith.constant 4 : index
    %c0_47 = arith.constant 0 : index
    %130 = vector.load %arg17[%c4_46, %c0_47] : memref<8x32xf32, #tpu.memory_space<vmem>>, vector<1x32xf32>
    tpu.vector_store %arg17[%c4_46, %c0_47], %129 {strides = array<i32>} : memref<8x32xf32, #tpu.memory_space<vmem>>, vector<1x32xf32>,
    %c5 = arith.constant 5 : index
    %c0_48 = arith.constant 0 : index
    %131 = vector.load %arg16[%c5, %c0_48] : memref<8x128xf32, #tpu.memory_space<vmem>>, vector<1x128xf32>
    %132 = arith.truncf %129 : vector<1x32xf32> to vector<1x32xbf16>
    %cst_49 = arith.constant dense<0.000000e+00> : vector<1x128xf32>
    %133 = tpu.matmul %132, %23, %cst_49 {dimension_numbers = #tpu.dot_dimension_numbers<[1], [0], [0], [1], [0, 0, 1, 1], [], []>} : vector<1x32xbf16>, vector<32x128xbf16>, vector<1x128xf32> -> vector<1x128xf32>
    %134 = arith.addf %131, %133 : vector<1x128xf32>
    %cst_50 = arith.constant 0.000000e+00 : f32
    %135 = vector.broadcast %cst_50 : f32 to vector<1x128xf32>
    %136 = arith.subf %135, %134 : vector<1x128xf32>
    %137 = math.exp %136 : vector<1x128xf32>
    %cst_51 = arith.constant 1.000000e+00 : f32
    %138 = vector.broadcast %cst_51 : f32 to vector<1x128xf32>
    %139 = arith.addf %138, %137 : vector<1x128xf32>
    %140 = tpu.reciprocal %139 {approx = true} : vector<1x128xf32> -> vector<1x128xf32>
    %141 = math.tanh %134 : vector<1x128xf32>
    %142 = vector.extract_strided_slice %140 {offsets = [0, 0], sizes = [1, 32], strides = [1, 1]} : vector<1x128xf32> to vector<1x32xf32>
    %143 = vector.extract_strided_slice %140 {offsets = [0, 32], sizes = [1, 32], strides = [1, 1]} : vector<1x128xf32> to vector<1x32xf32>
    %144 = vector.extract_strided_slice %141 {offsets = [0, 64], sizes = [1, 32], strides = [1, 1]} : vector<1x128xf32> to vector<1x32xf32>
    %145 = vector.extract_strided_slice %140 {offsets = [0, 96], sizes = [1, 32], strides = [1, 1]} : vector<1x128xf32> to vector<1x32xf32>
    %146 = arith.mulf %143, %127 : vector<1x32xf32>
    %147 = arith.mulf %142, %144 : vector<1x32xf32>
    %148 = arith.addf %146, %147 : vector<1x32xf32>
    %149 = math.tanh %148 : vector<1x32xf32>
    %150 = arith.mulf %145, %149 : vector<1x32xf32>
    %c5_52 = arith.constant 5 : index
    %c0_53 = arith.constant 0 : index
    %151 = vector.load %arg17[%c5_52, %c0_53] : memref<8x32xf32, #tpu.memory_space<vmem>>, vector<1x32xf32>
    tpu.vector_store %arg17[%c5_52, %c0_53], %150 {strides = array<i32>} : memref<8x32xf32, #tpu.memory_space<vmem>>, vector<1x32xf32>,
    %c6 = arith.constant 6 : index
    %c0_54 = arith.constant 0 : index
    %152 = vector.load %arg16[%c6, %c0_54] : memref<8x128xf32, #tpu.memory_space<vmem>>, vector<1x128xf32>
    %153 = arith.truncf %150 : vector<1x32xf32> to vector<1x32xbf16>
    %cst_55 = arith.constant dense<0.000000e+00> : vector<1x128xf32>
    %154 = tpu.matmul %153, %23, %cst_55 {dimension_numbers = #tpu.dot_dimension_numbers<[1], [0], [0], [1], [0, 0, 1, 1], [], []>} : vector<1x32xbf16>, vector<32x128xbf16>, vector<1x128xf32> -> vector<1x128xf32>
    %155 = arith.addf %152, %154 : vector<1x128xf32>
    %cst_56 = arith.constant 0.000000e+00 : f32
    %156 = vector.broadcast %cst_56 : f32 to vector<1x128xf32>
    %157 = arith.subf %156, %155 : vector<1x128xf32>
    %158 = math.exp %157 : vector<1x128xf32>
    %cst_57 = arith.constant 1.000000e+00 : f32
    %159 = vector.broadcast %cst_57 : f32 to vector<1x128xf32>
    %160 = arith.addf %159, %158 : vector<1x128xf32>
    %161 = tpu.reciprocal %160 {approx = true} : vector<1x128xf32> -> vector<1x128xf32>
    %162 = math.tanh %155 : vector<1x128xf32>
    %163 = vector.extract_strided_slice %161 {offsets = [0, 0], sizes = [1, 32], strides = [1, 1]} : vector<1x128xf32> to vector<1x32xf32>
    %164 = vector.extract_strided_slice %161 {offsets = [0, 32], sizes = [1, 32], strides = [1, 1]} : vector<1x128xf32> to vector<1x32xf32>
    %165 = vector.extract_strided_slice %162 {offsets = [0, 64], sizes = [1, 32], strides = [1, 1]} : vector<1x128xf32> to vector<1x32xf32>
    %166 = vector.extract_strided_slice %161 {offsets = [0, 96], sizes = [1, 32], strides = [1, 1]} : vector<1x128xf32> to vector<1x32xf32>
    %167 = arith.mulf %164, %148 : vector<1x32xf32>
    %168 = arith.mulf %163, %165 : vector<1x32xf32>
    %169 = arith.addf %167, %168 : vector<1x32xf32>
    %170 = math.tanh %169 : vector<1x32xf32>
    %171 = arith.mulf %166, %170 : vector<1x32xf32>
    %c6_58 = arith.constant 6 : index
    %c0_59 = arith.constant 0 : index
    %172 = vector.load %arg17[%c6_58, %c0_59] : memref<8x32xf32, #tpu.memory_space<vmem>>, vector<1x32xf32>
    tpu.vector_store %arg17[%c6_58, %c0_59], %171 {strides = array<i32>} : memref<8x32xf32, #tpu.memory_space<vmem>>, vector<1x32xf32>,
    %c7 = arith.constant 7 : index
    %c0_60 = arith.constant 0 : index
    %173 = vector.load %arg16[%c7, %c0_60] : memref<8x128xf32, #tpu.memory_space<vmem>>, vector<1x128xf32>
    %174 = arith.truncf %171 : vector<1x32xf32> to vector<1x32xbf16>
    %cst_61 = arith.constant dense<0.000000e+00> : vector<1x128xf32>
    %175 = tpu.matmul %174, %23, %cst_61 {dimension_numbers = #tpu.dot_dimension_numbers<[1], [0], [0], [1], [0, 0, 1, 1], [], []>} : vector<1x32xbf16>, vector<32x128xbf16>, vector<1x128xf32> -> vector<1x128xf32>
    %176 = arith.addf %173, %175 : vector<1x128xf32>
    %cst_62 = arith.constant 0.000000e+00 : f32
    %177 = vector.broadcast %cst_62 : f32 to vector<1x128xf32>
    %178 = arith.subf %177, %176 : vector<1x128xf32>
    %179 = math.exp %178 : vector<1x128xf32>
    %cst_63 = arith.constant 1.000000e+00 : f32
    %180 = vector.broadcast %cst_63 : f32 to vector<1x128xf32>
    %181 = arith.addf %180, %179 : vector<1x128xf32>
    %182 = tpu.reciprocal %181 {approx = true} : vector<1x128xf32> -> vector<1x128xf32>
    %183 = math.tanh %176 : vector<1x128xf32>
    %184 = vector.extract_strided_slice %182 {offsets = [0, 0], sizes = [1, 32], strides = [1, 1]} : vector<1x128xf32> to vector<1x32xf32>
    %185 = vector.extract_strided_slice %182 {offsets = [0, 32], sizes = [1, 32], strides = [1, 1]} : vector<1x128xf32> to vector<1x32xf32>
    %186 = vector.extract_strided_slice %183 {offsets = [0, 64], sizes = [1, 32], strides = [1, 1]} : vector<1x128xf32> to vector<1x32xf32>
    %187 = vector.extract_strided_slice %182 {offsets = [0, 96], sizes = [1, 32], strides = [1, 1]} : vector<1x128xf32> to vector<1x32xf32>
    %188 = arith.mulf %185, %169 : vector<1x32xf32>
    %189 = arith.mulf %184, %186 : vector<1x32xf32>
    %190 = arith.addf %188, %189 : vector<1x32xf32>
    %191 = math.tanh %190 : vector<1x32xf32>
    %192 = arith.mulf %187, %191 : vector<1x32xf32>
    %c7_64 = arith.constant 7 : index
    %c0_65 = arith.constant 0 : index
    %193 = vector.load %arg17[%c7_64, %c0_65] : memref<8x32xf32, #tpu.memory_space<vmem>>, vector<1x32xf32>
    tpu.vector_store %arg17[%c7_64, %c0_65], %192 {strides = array<i32>} : memref<8x32xf32, #tpu.memory_space<vmem>>, vector<1x32xf32>,
    %c0_66 = arith.constant 0 : index
    %c0_67 = arith.constant 0 : index
    %194 = vector.load %arg17[%c0_66, %c0_67] : memref<8x32xf32, #tpu.memory_space<vmem>>, vector<8x32xf32>
    %195 = vector.extract_strided_slice %194 {offsets = [0, 16], sizes = [8, 16], strides = [1, 1]} : vector<8x32xf32> to vector<8x16xf32>
    %cst_68 = arith.constant dense<0.000000e+00> : vector<8x16xf32>
    %196 = tpu.matmul %12, %195, %cst_68 {dimension_numbers = #tpu.dot_dimension_numbers<[1], [0], [0], [1], [0, 0, 1, 1], [], []>} : vector<8x8xf32>, vector<8x16xf32>, vector<8x16xf32> -> vector<8x16xf32>
    %197 = vector.extract_strided_slice %194 {offsets = [0, 0], sizes = [8, 16], strides = [1, 1]} : vector<8x32xf32> to vector<8x16xf32>
    %c0_69 = arith.constant 0 : index
    %c0_70 = arith.constant 0 : index
    %198 = vector.load %arg7[%c0_69, %c0_70] : memref<16x128xf32, #tpu.memory_space<vmem>>, vector<16x128xf32>
    %cst_71 = arith.constant dense<0.000000e+00> : vector<8x128xf32>
    %199 = tpu.matmul %197, %198, %cst_71 {dimension_numbers = #tpu.dot_dimension_numbers<[1], [0], [0], [1], [0, 0, 1, 1], [], []>} : vector<8x16xf32>, vector<16x128xf32>, vector<8x128xf32> -> vector<8x128xf32>
    %c0_72 = arith.constant 0 : index
    %c0_73 = arith.constant 0 : index
    %200 = vector.load %arg8[%c0_72, %c0_73] : memref<16x128xf32, #tpu.memory_space<vmem>>, vector<16x128xf32>
    %cst_74 = arith.constant dense<0.000000e+00> : vector<8x128xf32>
    %201 = tpu.matmul %196, %200, %cst_74 {dimension_numbers = #tpu.dot_dimension_numbers<[1], [0], [0], [1], [0, 0, 1, 1], [], []>} : vector<8x16xf32>, vector<16x128xf32>, vector<8x128xf32> -> vector<8x128xf32>
    %202 = arith.addf %199, %201 : vector<8x128xf32>
    %c0_75 = arith.constant 0 : index
    %c0_76 = arith.constant 0 : index
    %203 = vector.load %arg9[%c0_75, %c0_76] : memref<1x128xf32, #tpu.memory_space<vmem>>, vector<1x128xf32>
    %204 = vector.broadcast %203 : vector<1x128xf32> to vector<8x128xf32>
    %205 = arith.addf %202, %204 : vector<8x128xf32>
    %c0_77 = arith.constant 0 : index
    %c0_78 = arith.constant 0 : index
    %206 = vector.load %arg12[%c0_77, %c0_78] : memref<8x128xf32, #tpu.memory_space<vmem>>, vector<8x128xf32>
    tpu.vector_store %arg12[%c0_77, %c0_78], %205 {strides = array<i32>} : memref<8x128xf32, #tpu.memory_space<vmem>>, vector<8x128xf32>,
    %c0_79 = arith.constant 0 : index
    %c0_80 = arith.constant 0 : index
    %207 = vector.load %arg10[%c0_79, %c0_80] : memref<8x128xf32, #tpu.memory_space<vmem>>, vector<8x128xf32>
    %208 = tpu.iota {dimensions = array<i32: 0>} : vector<8x128xi32>
    %209 = arith.sitofp %208 : vector<8x128xi32> to vector<8x128xf32>
    %210 = tpu.iota {dimensions = array<i32: 0>} : vector<8x128xi32>
    %211 = tpu.iota {dimensions = array<i32: 1>} : vector<8x128xi32>
    %212 = arith.cmpi eq, %210, %211 : vector<8x128xi32>
    %213 = tpu.iota {dimensions = array<i32: 0>} : vector<8x1xi32>
    %c3_i32 = arith.constant 3 : i32
    %214 = vector.broadcast %c3_i32 : i32 to vector<8x1xi32>
    %215 = arith.cmpi eq, %213, %214 : vector<8x1xi32>
    %cst_81 = arith.constant 0.000000e+00 : f32
    %cst_82 = arith.constant -1.000000e+04 : f32
    %216 = vector.broadcast %cst_81 : f32 to vector<8x1xf32>
    %217 = vector.broadcast %cst_82 : f32 to vector<8x1xf32>
    %218 = arith.select %215, %216, %217 : vector<8x1xi1>, vector<8x1xf32>
    %219 = tpu.iota {dimensions = array<i32: 1>} : vector<1x128xi32>
    %220 = arith.sitofp %219 : vector<1x128xi32> to vector<1x128xf32>
    %221 = vector.broadcast %218 : vector<8x1xf32> to vector<8x128xf32>
    %222 = arith.addf %221, %207 : vector<8x128xf32>
    %cst_83 = arith.constant dense<0xFF800000> : vector<128xf32>
    %223 = vector.multi_reduction <maximumf>, %222, %cst_83 [0] : vector<8x128xf32> to vector<128xf32>
    %224 = vector.shape_cast %223 : vector<128xf32> to vector<1x128xf32>
    %225 = vector.broadcast %224 : vector<1x128xf32> to vector<8x128xf32>
    %226 = arith.cmpf oeq, %222, %225 : vector<8x128xf32>
    %cst_84 = arith.constant 8.000000e+00 : f32
    %227 = vector.broadcast %cst_84 : f32 to vector<8x128xf32>
    %228 = arith.select %226, %209, %227 : vector<8x128xi1>, vector<8x128xf32>
    %cst_85 = arith.constant dense<0x7F800000> : vector<128xf32>
    %229 = vector.multi_reduction <minimumf>, %228, %cst_85 [0] : vector<8x128xf32> to vector<128xf32>
    %230 = vector.shape_cast %229 : vector<128xf32> to vector<1x128xf32>
    %c0_86 = arith.constant 0 : index
    %c0_87 = arith.constant 0 : index
    %231 = vector.load %arg18[%c0_86, %c0_87] : memref<8x128xf32, #tpu.memory_space<vmem>>, vector<1x128xf32>
    tpu.vector_store %arg18[%c0_86, %c0_87], %230 {strides = array<i32>} : memref<8x128xf32, #tpu.memory_space<vmem>>, vector<1x128xf32>,
    %c0_88 = arith.constant 0 : index
    %c0_89 = arith.constant 0 : index
    %232 = vector.load %arg12[%c0_88, %c0_89] : memref<8x128xf32, #tpu.memory_space<vmem>>, vector<1x128xf32>
    %233 = arith.addf %224, %232 : vector<1x128xf32>
    %cst_90 = arith.constant 0.000000e+00 : f32
    %234 = vector.shape_cast %233 : vector<1x128xf32> to vector<1x128xf32>
    %235 = vector.broadcast %234 : vector<1x128xf32> to vector<8x128xf32>
    %236 = vector.broadcast %cst_90 : f32 to vector<8x128xf32>
    %237 = arith.select %212, %235, %236 : vector<8x128xi1>, vector<8x128xf32>
    %cst_91 = arith.constant dense<0.000000e+00> : vector<8xf32>
    %238 = vector.multi_reduction <add>, %237, %cst_91 [1] : vector<8x128xf32> to vector<8xf32>
    %239 = vector.shape_cast %238 : vector<8xf32> to vector<8x1xf32>
    %240 = vector.broadcast %239 : vector<8x1xf32> to vector<8x128xf32>
    %241 = arith.addf %240, %207 : vector<8x128xf32>
    %cst_92 = arith.constant dense<0xFF800000> : vector<128xf32>
    %242 = vector.multi_reduction <maximumf>, %241, %cst_92 [0] : vector<8x128xf32> to vector<128xf32>
    %243 = vector.shape_cast %242 : vector<128xf32> to vector<1x128xf32>
    %244 = vector.broadcast %243 : vector<1x128xf32> to vector<8x128xf32>
    %245 = arith.cmpf oeq, %241, %244 : vector<8x128xf32>
    %cst_93 = arith.constant 8.000000e+00 : f32
    %246 = vector.broadcast %cst_93 : f32 to vector<8x128xf32>
    %247 = arith.select %245, %209, %246 : vector<8x128xi1>, vector<8x128xf32>
    %cst_94 = arith.constant dense<0x7F800000> : vector<128xf32>
    %248 = vector.multi_reduction <minimumf>, %247, %cst_94 [0] : vector<8x128xf32> to vector<128xf32>
    %249 = vector.shape_cast %248 : vector<128xf32> to vector<1x128xf32>
    %c1_95 = arith.constant 1 : index
    %c0_96 = arith.constant 0 : index
    %250 = vector.load %arg18[%c1_95, %c0_96] : memref<8x128xf32, #tpu.memory_space<vmem>>, vector<1x128xf32>
    tpu.vector_store %arg18[%c1_95, %c0_96], %249 {strides = array<i32>} : memref<8x128xf32, #tpu.memory_space<vmem>>, vector<1x128xf32>,
    %c1_97 = arith.constant 1 : index
    %c0_98 = arith.constant 0 : index
    %251 = vector.load %arg12[%c1_97, %c0_98] : memref<8x128xf32, #tpu.memory_space<vmem>>, vector<1x128xf32>
    %252 = arith.addf %243, %251 : vector<1x128xf32>
    %cst_99 = arith.constant 0.000000e+00 : f32
    %253 = vector.shape_cast %252 : vector<1x128xf32> to vector<1x128xf32>
    %254 = vector.broadcast %253 : vector<1x128xf32> to vector<8x128xf32>
    %255 = vector.broadcast %cst_99 : f32 to vector<8x128xf32>
    %256 = arith.select %212, %254, %255 : vector<8x128xi1>, vector<8x128xf32>
    %cst_100 = arith.constant dense<0.000000e+00> : vector<8xf32>
    %257 = vector.multi_reduction <add>, %256, %cst_100 [1] : vector<8x128xf32> to vector<8xf32>
    %258 = vector.shape_cast %257 : vector<8xf32> to vector<8x1xf32>
    %259 = vector.broadcast %258 : vector<8x1xf32> to vector<8x128xf32>
    %260 = arith.addf %259, %207 : vector<8x128xf32>
    %cst_101 = arith.constant dense<0xFF800000> : vector<128xf32>
    %261 = vector.multi_reduction <maximumf>, %260, %cst_101 [0] : vector<8x128xf32> to vector<128xf32>
    %262 = vector.shape_cast %261 : vector<128xf32> to vector<1x128xf32>
    %263 = vector.broadcast %262 : vector<1x128xf32> to vector<8x128xf32>
    %264 = arith.cmpf oeq, %260, %263 : vector<8x128xf32>
    %cst_102 = arith.constant 8.000000e+00 : f32
    %265 = vector.broadcast %cst_102 : f32 to vector<8x128xf32>
    %266 = arith.select %264, %209, %265 : vector<8x128xi1>, vector<8x128xf32>
    %cst_103 = arith.constant dense<0x7F800000> : vector<128xf32>
    %267 = vector.multi_reduction <minimumf>, %266, %cst_103 [0] : vector<8x128xf32> to vector<128xf32>
    %268 = vector.shape_cast %267 : vector<128xf32> to vector<1x128xf32>
    %c2_104 = arith.constant 2 : index
    %c0_105 = arith.constant 0 : index
    %269 = vector.load %arg18[%c2_104, %c0_105] : memref<8x128xf32, #tpu.memory_space<vmem>>, vector<1x128xf32>
    tpu.vector_store %arg18[%c2_104, %c0_105], %268 {strides = array<i32>} : memref<8x128xf32, #tpu.memory_space<vmem>>, vector<1x128xf32>,
    %c2_106 = arith.constant 2 : index
    %c0_107 = arith.constant 0 : index
    %270 = vector.load %arg12[%c2_106, %c0_107] : memref<8x128xf32, #tpu.memory_space<vmem>>, vector<1x128xf32>
    %271 = arith.addf %262, %270 : vector<1x128xf32>
    %cst_108 = arith.constant 0.000000e+00 : f32
    %272 = vector.shape_cast %271 : vector<1x128xf32> to vector<1x128xf32>
    %273 = vector.broadcast %272 : vector<1x128xf32> to vector<8x128xf32>
    %274 = vector.broadcast %cst_108 : f32 to vector<8x128xf32>
    %275 = arith.select %212, %273, %274 : vector<8x128xi1>, vector<8x128xf32>
    %cst_109 = arith.constant dense<0.000000e+00> : vector<8xf32>
    %276 = vector.multi_reduction <add>, %275, %cst_109 [1] : vector<8x128xf32> to vector<8xf32>
    %277 = vector.shape_cast %276 : vector<8xf32> to vector<8x1xf32>
    %278 = vector.broadcast %277 : vector<8x1xf32> to vector<8x128xf32>
    %279 = arith.addf %278, %207 : vector<8x128xf32>
    %cst_110 = arith.constant dense<0xFF800000> : vector<128xf32>
    %280 = vector.multi_reduction <maximumf>, %279, %cst_110 [0] : vector<8x128xf32> to vector<128xf32>
    %281 = vector.shape_cast %280 : vector<128xf32> to vector<1x128xf32>
    %282 = vector.broadcast %281 : vector<1x128xf32> to vector<8x128xf32>
    %283 = arith.cmpf oeq, %279, %282 : vector<8x128xf32>
    %cst_111 = arith.constant 8.000000e+00 : f32
    %284 = vector.broadcast %cst_111 : f32 to vector<8x128xf32>
    %285 = arith.select %283, %209, %284 : vector<8x128xi1>, vector<8x128xf32>
    %cst_112 = arith.constant dense<0x7F800000> : vector<128xf32>
    %286 = vector.multi_reduction <minimumf>, %285, %cst_112 [0] : vector<8x128xf32> to vector<128xf32>
    %287 = vector.shape_cast %286 : vector<128xf32> to vector<1x128xf32>
    %c3_113 = arith.constant 3 : index
    %c0_114 = arith.constant 0 : index
    %288 = vector.load %arg18[%c3_113, %c0_114] : memref<8x128xf32, #tpu.memory_space<vmem>>, vector<1x128xf32>
    tpu.vector_store %arg18[%c3_113, %c0_114], %287 {strides = array<i32>} : memref<8x128xf32, #tpu.memory_space<vmem>>, vector<1x128xf32>,
    %c3_115 = arith.constant 3 : index
    %c0_116 = arith.constant 0 : index
    %289 = vector.load %arg12[%c3_115, %c0_116] : memref<8x128xf32, #tpu.memory_space<vmem>>, vector<1x128xf32>
    %290 = arith.addf %281, %289 : vector<1x128xf32>
    %cst_117 = arith.constant 0.000000e+00 : f32
    %291 = vector.shape_cast %290 : vector<1x128xf32> to vector<1x128xf32>
    %292 = vector.broadcast %291 : vector<1x128xf32> to vector<8x128xf32>
    %293 = vector.broadcast %cst_117 : f32 to vector<8x128xf32>
    %294 = arith.select %212, %292, %293 : vector<8x128xi1>, vector<8x128xf32>
    %cst_118 = arith.constant dense<0.000000e+00> : vector<8xf32>
    %295 = vector.multi_reduction <add>, %294, %cst_118 [1] : vector<8x128xf32> to vector<8xf32>
    %296 = vector.shape_cast %295 : vector<8xf32> to vector<8x1xf32>
    %297 = vector.broadcast %296 : vector<8x1xf32> to vector<8x128xf32>
    %298 = arith.addf %297, %207 : vector<8x128xf32>
    %cst_119 = arith.constant dense<0xFF800000> : vector<128xf32>
    %299 = vector.multi_reduction <maximumf>, %298, %cst_119 [0] : vector<8x128xf32> to vector<128xf32>
    %300 = vector.shape_cast %299 : vector<128xf32> to vector<1x128xf32>
    %301 = vector.broadcast %300 : vector<1x128xf32> to vector<8x128xf32>
    %302 = arith.cmpf oeq, %298, %301 : vector<8x128xf32>
    %cst_120 = arith.constant 8.000000e+00 : f32
    %303 = vector.broadcast %cst_120 : f32 to vector<8x128xf32>
    %304 = arith.select %302, %209, %303 : vector<8x128xi1>, vector<8x128xf32>
    %cst_121 = arith.constant dense<0x7F800000> : vector<128xf32>
    %305 = vector.multi_reduction <minimumf>, %304, %cst_121 [0] : vector<8x128xf32> to vector<128xf32>
    %306 = vector.shape_cast %305 : vector<128xf32> to vector<1x128xf32>
    %c4_122 = arith.constant 4 : index
    %c0_123 = arith.constant 0 : index
    %307 = vector.load %arg18[%c4_122, %c0_123] : memref<8x128xf32, #tpu.memory_space<vmem>>, vector<1x128xf32>
    tpu.vector_store %arg18[%c4_122, %c0_123], %306 {strides = array<i32>} : memref<8x128xf32, #tpu.memory_space<vmem>>, vector<1x128xf32>,
    %c4_124 = arith.constant 4 : index
    %c0_125 = arith.constant 0 : index
    %308 = vector.load %arg12[%c4_124, %c0_125] : memref<8x128xf32, #tpu.memory_space<vmem>>, vector<1x128xf32>
    %309 = arith.addf %300, %308 : vector<1x128xf32>
    %cst_126 = arith.constant 0.000000e+00 : f32
    %310 = vector.shape_cast %309 : vector<1x128xf32> to vector<1x128xf32>
    %311 = vector.broadcast %310 : vector<1x128xf32> to vector<8x128xf32>
    %312 = vector.broadcast %cst_126 : f32 to vector<8x128xf32>
    %313 = arith.select %212, %311, %312 : vector<8x128xi1>, vector<8x128xf32>
    %cst_127 = arith.constant dense<0.000000e+00> : vector<8xf32>
    %314 = vector.multi_reduction <add>, %313, %cst_127 [1] : vector<8x128xf32> to vector<8xf32>
    %315 = vector.shape_cast %314 : vector<8xf32> to vector<8x1xf32>
    %316 = vector.broadcast %315 : vector<8x1xf32> to vector<8x128xf32>
    %317 = arith.addf %316, %207 : vector<8x128xf32>
    %cst_128 = arith.constant dense<0xFF800000> : vector<128xf32>
    %318 = vector.multi_reduction <maximumf>, %317, %cst_128 [0] : vector<8x128xf32> to vector<128xf32>
    %319 = vector.shape_cast %318 : vector<128xf32> to vector<1x128xf32>
    %320 = vector.broadcast %319 : vector<1x128xf32> to vector<8x128xf32>
    %321 = arith.cmpf oeq, %317, %320 : vector<8x128xf32>
    %cst_129 = arith.constant 8.000000e+00 : f32
    %322 = vector.broadcast %cst_129 : f32 to vector<8x128xf32>
    %323 = arith.select %321, %209, %322 : vector<8x128xi1>, vector<8x128xf32>
    %cst_130 = arith.constant dense<0x7F800000> : vector<128xf32>
    %324 = vector.multi_reduction <minimumf>, %323, %cst_130 [0] : vector<8x128xf32> to vector<128xf32>
    %325 = vector.shape_cast %324 : vector<128xf32> to vector<1x128xf32>
    %c5_131 = arith.constant 5 : index
    %c0_132 = arith.constant 0 : index
    %326 = vector.load %arg18[%c5_131, %c0_132] : memref<8x128xf32, #tpu.memory_space<vmem>>, vector<1x128xf32>
    tpu.vector_store %arg18[%c5_131, %c0_132], %325 {strides = array<i32>} : memref<8x128xf32, #tpu.memory_space<vmem>>, vector<1x128xf32>,
    %c5_133 = arith.constant 5 : index
    %c0_134 = arith.constant 0 : index
    %327 = vector.load %arg12[%c5_133, %c0_134] : memref<8x128xf32, #tpu.memory_space<vmem>>, vector<1x128xf32>
    %328 = arith.addf %319, %327 : vector<1x128xf32>
    %cst_135 = arith.constant 0.000000e+00 : f32
    %329 = vector.shape_cast %328 : vector<1x128xf32> to vector<1x128xf32>
    %330 = vector.broadcast %329 : vector<1x128xf32> to vector<8x128xf32>
    %331 = vector.broadcast %cst_135 : f32 to vector<8x128xf32>
    %332 = arith.select %212, %330, %331 : vector<8x128xi1>, vector<8x128xf32>
    %cst_136 = arith.constant dense<0.000000e+00> : vector<8xf32>
    %333 = vector.multi_reduction <add>, %332, %cst_136 [1] : vector<8x128xf32> to vector<8xf32>
    %334 = vector.shape_cast %333 : vector<8xf32> to vector<8x1xf32>
    %335 = vector.broadcast %334 : vector<8x1xf32> to vector<8x128xf32>
    %336 = arith.addf %335, %207 : vector<8x128xf32>
    %cst_137 = arith.constant dense<0xFF800000> : vector<128xf32>
    %337 = vector.multi_reduction <maximumf>, %336, %cst_137 [0] : vector<8x128xf32> to vector<128xf32>
    %338 = vector.shape_cast %337 : vector<128xf32> to vector<1x128xf32>
    %339 = vector.broadcast %338 : vector<1x128xf32> to vector<8x128xf32>
    %340 = arith.cmpf oeq, %336, %339 : vector<8x128xf32>
    %cst_138 = arith.constant 8.000000e+00 : f32
    %341 = vector.broadcast %cst_138 : f32 to vector<8x128xf32>
    %342 = arith.select %340, %209, %341 : vector<8x128xi1>, vector<8x128xf32>
    %cst_139 = arith.constant dense<0x7F800000> : vector<128xf32>
    %343 = vector.multi_reduction <minimumf>, %342, %cst_139 [0] : vector<8x128xf32> to vector<128xf32>
    %344 = vector.shape_cast %343 : vector<128xf32> to vector<1x128xf32>
    %c6_140 = arith.constant 6 : index
    %c0_141 = arith.constant 0 : index
    %345 = vector.load %arg18[%c6_140, %c0_141] : memref<8x128xf32, #tpu.memory_space<vmem>>, vector<1x128xf32>
    tpu.vector_store %arg18[%c6_140, %c0_141], %344 {strides = array<i32>} : memref<8x128xf32, #tpu.memory_space<vmem>>, vector<1x128xf32>,
    %c6_142 = arith.constant 6 : index
    %c0_143 = arith.constant 0 : index
    %346 = vector.load %arg12[%c6_142, %c0_143] : memref<8x128xf32, #tpu.memory_space<vmem>>, vector<1x128xf32>
    %347 = arith.addf %338, %346 : vector<1x128xf32>
    %cst_144 = arith.constant 0.000000e+00 : f32
    %348 = vector.shape_cast %347 : vector<1x128xf32> to vector<1x128xf32>
    %349 = vector.broadcast %348 : vector<1x128xf32> to vector<8x128xf32>
    %350 = vector.broadcast %cst_144 : f32 to vector<8x128xf32>
    %351 = arith.select %212, %349, %350 : vector<8x128xi1>, vector<8x128xf32>
    %cst_145 = arith.constant dense<0.000000e+00> : vector<8xf32>
    %352 = vector.multi_reduction <add>, %351, %cst_145 [1] : vector<8x128xf32> to vector<8xf32>
    %353 = vector.shape_cast %352 : vector<8xf32> to vector<8x1xf32>
    %354 = vector.broadcast %353 : vector<8x1xf32> to vector<8x128xf32>
    %355 = arith.addf %354, %207 : vector<8x128xf32>
    %cst_146 = arith.constant dense<0xFF800000> : vector<128xf32>
    %356 = vector.multi_reduction <maximumf>, %355, %cst_146 [0] : vector<8x128xf32> to vector<128xf32>
    %357 = vector.shape_cast %356 : vector<128xf32> to vector<1x128xf32>
    %358 = vector.broadcast %357 : vector<1x128xf32> to vector<8x128xf32>
    %359 = arith.cmpf oeq, %355, %358 : vector<8x128xf32>
    %cst_147 = arith.constant 8.000000e+00 : f32
    %360 = vector.broadcast %cst_147 : f32 to vector<8x128xf32>
    %361 = arith.select %359, %209, %360 : vector<8x128xi1>, vector<8x128xf32>
    %cst_148 = arith.constant dense<0x7F800000> : vector<128xf32>
    %362 = vector.multi_reduction <minimumf>, %361, %cst_148 [0] : vector<8x128xf32> to vector<128xf32>
    %363 = vector.shape_cast %362 : vector<128xf32> to vector<1x128xf32>
    %c7_149 = arith.constant 7 : index
    %c0_150 = arith.constant 0 : index
    %364 = vector.load %arg18[%c7_149, %c0_150] : memref<8x128xf32, #tpu.memory_space<vmem>>, vector<1x128xf32>
    tpu.vector_store %arg18[%c7_149, %c0_150], %363 {strides = array<i32>} : memref<8x128xf32, #tpu.memory_space<vmem>>, vector<1x128xf32>,
    %c7_151 = arith.constant 7 : index
    %c0_152 = arith.constant 0 : index
    %365 = vector.load %arg12[%c7_151, %c0_152] : memref<8x128xf32, #tpu.memory_space<vmem>>, vector<1x128xf32>
    %366 = arith.addf %357, %365 : vector<1x128xf32>
    %c0_153 = arith.constant 0 : index
    %c0_154 = arith.constant 0 : index
    %367 = vector.load %arg11[%c0_153, %c0_154] : memref<1x128xf32, #tpu.memory_space<vmem>>, vector<1x128xf32>
    %368 = arith.addf %366, %367 : vector<1x128xf32>
    %cst_155 = arith.constant dense<0xFF800000> : vector<1xf32>
    %369 = vector.multi_reduction <maximumf>, %368, %cst_155 [1] : vector<1x128xf32> to vector<1xf32>
    %370 = vector.shape_cast %369 : vector<1xf32> to vector<1x1xf32>
    %371 = vector.broadcast %370 : vector<1x1xf32> to vector<1x128xf32>
    %372 = arith.cmpf oeq, %368, %371 : vector<1x128xf32>
    %cst_156 = arith.constant 1.280000e+02 : f32
    %373 = vector.broadcast %cst_156 : f32 to vector<1x128xf32>
    %374 = arith.select %372, %220, %373 : vector<1x128xi1>, vector<1x128xf32>
    %cst_157 = arith.constant dense<0x7F800000> : vector<1xf32>
    %375 = vector.multi_reduction <minimumf>, %374, %cst_157 [1] : vector<1x128xf32> to vector<1xf32>
    %376 = vector.shape_cast %375 : vector<1xf32> to vector<1x1xf32>
    %c0_158 = arith.constant 0 : index
    %c0_159 = arith.constant 0 : index
    %377 = vector.load %arg14[%c0_158, %c0_159] : memref<1x1xf32, #tpu.memory_space<vmem>>, vector<1x1xf32>
    tpu.vector_store %arg14[%c0_158, %c0_159], %370 {strides = array<i32>} : memref<1x1xf32, #tpu.memory_space<vmem>>, vector<1x1xf32>,
    %378 = vector.broadcast %376 : vector<1x1xf32> to vector<1x128xf32>
    %379 = arith.cmpf oeq, %220, %378 : vector<1x128xf32>
    %380 = arith.extui %379 : vector<1x128xi1> to vector<1x128xi32>
    %381 = arith.sitofp %380 : vector<1x128xi32> to vector<1x128xf32>
    %c7_160 = arith.constant 7 : index
    %c0_161 = arith.constant 0 : index
    %382 = vector.load %arg19[%c7_160, %c0_161] : memref<8x128xf32, #tpu.memory_space<vmem>>, vector<1x128xf32>
    tpu.vector_store %arg19[%c7_160, %c0_161], %381 {strides = array<i32>} : memref<8x128xf32, #tpu.memory_space<vmem>>, vector<1x128xf32>,
    %c7_162 = arith.constant 7 : index
    %c0_163 = arith.constant 0 : index
    %383 = vector.load %arg18[%c7_162, %c0_163] : memref<8x128xf32, #tpu.memory_space<vmem>>, vector<1x128xf32>
    %384 = arith.mulf %381, %383 : vector<1x128xf32>
    %cst_164 = arith.constant dense<0.000000e+00> : vector<1xf32>
    %385 = vector.multi_reduction <add>, %384, %cst_164 [1] : vector<1x128xf32> to vector<1xf32>
    %386 = vector.shape_cast %385 : vector<1xf32> to vector<1x1xf32>
    %387 = vector.broadcast %386 : vector<1x1xf32> to vector<1x128xf32>
    %388 = arith.cmpf oeq, %220, %387 : vector<1x128xf32>
    %389 = arith.extui %388 : vector<1x128xi1> to vector<1x128xi32>
    %390 = arith.sitofp %389 : vector<1x128xi32> to vector<1x128xf32>
    %c6_165 = arith.constant 6 : index
    %c0_166 = arith.constant 0 : index
    %391 = vector.load %arg19[%c6_165, %c0_166] : memref<8x128xf32, #tpu.memory_space<vmem>>, vector<1x128xf32>
    tpu.vector_store %arg19[%c6_165, %c0_166], %390 {strides = array<i32>} : memref<8x128xf32, #tpu.memory_space<vmem>>, vector<1x128xf32>,
    %c6_167 = arith.constant 6 : index
    %c0_168 = arith.constant 0 : index
    %392 = vector.load %arg18[%c6_167, %c0_168] : memref<8x128xf32, #tpu.memory_space<vmem>>, vector<1x128xf32>
    %393 = arith.mulf %390, %392 : vector<1x128xf32>
    %cst_169 = arith.constant dense<0.000000e+00> : vector<1xf32>
    %394 = vector.multi_reduction <add>, %393, %cst_169 [1] : vector<1x128xf32> to vector<1xf32>
    %395 = vector.shape_cast %394 : vector<1xf32> to vector<1x1xf32>
    %396 = vector.broadcast %395 : vector<1x1xf32> to vector<1x128xf32>
    %397 = arith.cmpf oeq, %220, %396 : vector<1x128xf32>
    %398 = arith.extui %397 : vector<1x128xi1> to vector<1x128xi32>
    %399 = arith.sitofp %398 : vector<1x128xi32> to vector<1x128xf32>
    %c5_170 = arith.constant 5 : index
    %c0_171 = arith.constant 0 : index
    %400 = vector.load %arg19[%c5_170, %c0_171] : memref<8x128xf32, #tpu.memory_space<vmem>>, vector<1x128xf32>
    tpu.vector_store %arg19[%c5_170, %c0_171], %399 {strides = array<i32>} : memref<8x128xf32, #tpu.memory_space<vmem>>, vector<1x128xf32>,
    %c5_172 = arith.constant 5 : index
    %c0_173 = arith.constant 0 : index
    %401 = vector.load %arg18[%c5_172, %c0_173] : memref<8x128xf32, #tpu.memory_space<vmem>>, vector<1x128xf32>
    %402 = arith.mulf %399, %401 : vector<1x128xf32>
    %cst_174 = arith.constant dense<0.000000e+00> : vector<1xf32>
    %403 = vector.multi_reduction <add>, %402, %cst_174 [1] : vector<1x128xf32> to vector<1xf32>
    %404 = vector.shape_cast %403 : vector<1xf32> to vector<1x1xf32>
    %405 = vector.broadcast %404 : vector<1x1xf32> to vector<1x128xf32>
    %406 = arith.cmpf oeq, %220, %405 : vector<1x128xf32>
    %407 = arith.extui %406 : vector<1x128xi1> to vector<1x128xi32>
    %408 = arith.sitofp %407 : vector<1x128xi32> to vector<1x128xf32>
    %c4_175 = arith.constant 4 : index
    %c0_176 = arith.constant 0 : index
    %409 = vector.load %arg19[%c4_175, %c0_176] : memref<8x128xf32, #tpu.memory_space<vmem>>, vector<1x128xf32>
    tpu.vector_store %arg19[%c4_175, %c0_176], %408 {strides = array<i32>} : memref<8x128xf32, #tpu.memory_space<vmem>>, vector<1x128xf32>,
    %c4_177 = arith.constant 4 : index
    %c0_178 = arith.constant 0 : index
    %410 = vector.load %arg18[%c4_177, %c0_178] : memref<8x128xf32, #tpu.memory_space<vmem>>, vector<1x128xf32>
    %411 = arith.mulf %408, %410 : vector<1x128xf32>
    %cst_179 = arith.constant dense<0.000000e+00> : vector<1xf32>
    %412 = vector.multi_reduction <add>, %411, %cst_179 [1] : vector<1x128xf32> to vector<1xf32>
    %413 = vector.shape_cast %412 : vector<1xf32> to vector<1x1xf32>
    %414 = vector.broadcast %413 : vector<1x1xf32> to vector<1x128xf32>
    %415 = arith.cmpf oeq, %220, %414 : vector<1x128xf32>
    %416 = arith.extui %415 : vector<1x128xi1> to vector<1x128xi32>
    %417 = arith.sitofp %416 : vector<1x128xi32> to vector<1x128xf32>
    %c3_180 = arith.constant 3 : index
    %c0_181 = arith.constant 0 : index
    %418 = vector.load %arg19[%c3_180, %c0_181] : memref<8x128xf32, #tpu.memory_space<vmem>>, vector<1x128xf32>
    tpu.vector_store %arg19[%c3_180, %c0_181], %417 {strides = array<i32>} : memref<8x128xf32, #tpu.memory_space<vmem>>, vector<1x128xf32>,
    %c3_182 = arith.constant 3 : index
    %c0_183 = arith.constant 0 : index
    %419 = vector.load %arg18[%c3_182, %c0_183] : memref<8x128xf32, #tpu.memory_space<vmem>>, vector<1x128xf32>
    %420 = arith.mulf %417, %419 : vector<1x128xf32>
    %cst_184 = arith.constant dense<0.000000e+00> : vector<1xf32>
    %421 = vector.multi_reduction <add>, %420, %cst_184 [1] : vector<1x128xf32> to vector<1xf32>
    %422 = vector.shape_cast %421 : vector<1xf32> to vector<1x1xf32>
    %423 = vector.broadcast %422 : vector<1x1xf32> to vector<1x128xf32>
    %424 = arith.cmpf oeq, %220, %423 : vector<1x128xf32>
    %425 = arith.extui %424 : vector<1x128xi1> to vector<1x128xi32>
    %426 = arith.sitofp %425 : vector<1x128xi32> to vector<1x128xf32>
    %c2_185 = arith.constant 2 : index
    %c0_186 = arith.constant 0 : index
    %427 = vector.load %arg19[%c2_185, %c0_186] : memref<8x128xf32, #tpu.memory_space<vmem>>, vector<1x128xf32>
    tpu.vector_store %arg19[%c2_185, %c0_186], %426 {strides = array<i32>} : memref<8x128xf32, #tpu.memory_space<vmem>>, vector<1x128xf32>,
    %c2_187 = arith.constant 2 : index
    %c0_188 = arith.constant 0 : index
    %428 = vector.load %arg18[%c2_187, %c0_188] : memref<8x128xf32, #tpu.memory_space<vmem>>, vector<1x128xf32>
    %429 = arith.mulf %426, %428 : vector<1x128xf32>
    %cst_189 = arith.constant dense<0.000000e+00> : vector<1xf32>
    %430 = vector.multi_reduction <add>, %429, %cst_189 [1] : vector<1x128xf32> to vector<1xf32>
    %431 = vector.shape_cast %430 : vector<1xf32> to vector<1x1xf32>
    %432 = vector.broadcast %431 : vector<1x1xf32> to vector<1x128xf32>
    %433 = arith.cmpf oeq, %220, %432 : vector<1x128xf32>
    %434 = arith.extui %433 : vector<1x128xi1> to vector<1x128xi32>
    %435 = arith.sitofp %434 : vector<1x128xi32> to vector<1x128xf32>
    %c1_190 = arith.constant 1 : index
    %c0_191 = arith.constant 0 : index
    %436 = vector.load %arg19[%c1_190, %c0_191] : memref<8x128xf32, #tpu.memory_space<vmem>>, vector<1x128xf32>
    tpu.vector_store %arg19[%c1_190, %c0_191], %435 {strides = array<i32>} : memref<8x128xf32, #tpu.memory_space<vmem>>, vector<1x128xf32>,
    %c1_192 = arith.constant 1 : index
    %c0_193 = arith.constant 0 : index
    %437 = vector.load %arg18[%c1_192, %c0_193] : memref<8x128xf32, #tpu.memory_space<vmem>>, vector<1x128xf32>
    %438 = arith.mulf %435, %437 : vector<1x128xf32>
    %cst_194 = arith.constant dense<0.000000e+00> : vector<1xf32>
    %439 = vector.multi_reduction <add>, %438, %cst_194 [1] : vector<1x128xf32> to vector<1xf32>
    %440 = vector.shape_cast %439 : vector<1xf32> to vector<1x1xf32>
    %441 = vector.broadcast %440 : vector<1x1xf32> to vector<1x128xf32>
    %442 = arith.cmpf oeq, %220, %441 : vector<1x128xf32>
    %443 = arith.extui %442 : vector<1x128xi1> to vector<1x128xi32>
    %444 = arith.sitofp %443 : vector<1x128xi32> to vector<1x128xf32>
    %c0_195 = arith.constant 0 : index
    %c0_196 = arith.constant 0 : index
    %445 = vector.load %arg19[%c0_195, %c0_196] : memref<8x128xf32, #tpu.memory_space<vmem>>, vector<1x128xf32>
    tpu.vector_store %arg19[%c0_195, %c0_196], %444 {strides = array<i32>} : memref<8x128xf32, #tpu.memory_space<vmem>>, vector<1x128xf32>,
    %c0_197 = arith.constant 0 : index
    %c0_198 = arith.constant 0 : index
    %446 = vector.load %arg18[%c0_197, %c0_198] : memref<8x128xf32, #tpu.memory_space<vmem>>, vector<1x128xf32>
    %447 = arith.mulf %444, %446 : vector<1x128xf32>
    %cst_199 = arith.constant dense<0.000000e+00> : vector<1xf32>
    %448 = vector.multi_reduction <add>, %447, %cst_199 [1] : vector<1x128xf32> to vector<1xf32>
    %449 = vector.shape_cast %448 : vector<1xf32> to vector<1x1xf32>
    %450 = arith.fptosi %449 : vector<1x1xf32> to vector<1x1xi32>
    %c0_200 = arith.constant 0 : index
    %c0_201 = arith.constant 0 : index
    %451 = vector.load %arg15[%c0_200, %c0_201] : memref<1x1xi32, #tpu.memory_space<vmem>>, vector<1x1xi32>
    tpu.vector_store %arg15[%c0_200, %c0_201], %450 {strides = array<i32>} : memref<1x1xi32, #tpu.memory_space<vmem>>, vector<1x1xi32>,
    %c0_202 = arith.constant 0 : index
    %c0_203 = arith.constant 0 : index
    %452 = vector.load %arg19[%c0_202, %c0_203] : memref<8x128xf32, #tpu.memory_space<vmem>>, vector<8x128xf32>
    %453 = vector.broadcast %220 : vector<1x128xf32> to vector<8x128xf32>
    %454 = arith.mulf %452, %453 : vector<8x128xf32>
    %cst_204 = arith.constant dense<0.000000e+00> : vector<8xf32>
    %455 = vector.multi_reduction <add>, %454, %cst_204 [1] : vector<8x128xf32> to vector<8xf32>
    %456 = vector.shape_cast %455 : vector<8xf32> to vector<8x1xf32>
    %457 = arith.fptosi %456 : vector<8x1xf32> to vector<8x1xi32>
    %c0_205 = arith.constant 0 : index
    %c0_206 = arith.constant 0 : index
    %458 = vector.load %arg13[%c0_205, %c0_206] : memref<8x1xi32, #tpu.memory_space<vmem>>, vector<8x1xi32>
    tpu.vector_store %arg13[%c0_205, %c0_206], %457 {strides = array<i32>} : memref<8x1xi32, #tpu.memory_space<vmem>>, vector<8x1xi32>,
    return
  }
}

</mosaic_0001>

<llo_original>
// kernel: _forward_impl.1
$region0: #{_forward_impl.1}
  #allocation0 [shape = 'u32[]', space=smem, size = 0x4, offset = 0x4, fixed_abs, tag = 'smem constant byte address 0x4 - core index']
  #allocation1 [shape = 'u32[72,128]{1,0:T(1,128)}', space=vmem, size = 0x9000, scoped, tag = 'internal scratch']
  #allocation2 [shape = 'f32[8,128]{1,0:T(8,128)}', space=vmem, size = 0x1000, scoped, tag = 'scratch operand']
  #allocation3 [shape = 'f32[8,32]{1,0:T(8,128)}', space=vmem, size = 0x1000, scoped, tag = 'scratch operand']
  #allocation4 [shape = 'f32[8,128]{1,0:T(8,128)}', space=vmem, size = 0x1000, scoped, tag = 'scratch operand']
  #allocation5 [shape = 'f32[8,128]{1,0:T(8,128)}', space=vmem, size = 0x1000, scoped, tag = 'scratch operand']
  %s0 = inlined_call_operand.vmem [shape: s32[8,1], index: 0, kind: input, shape index: {}]
  %s1 = inlined_call_operand.hbm [shape: f32[10,128], index: 1, kind: input, shape index: {}]
  %s2 = inlined_call_operand.hbm [shape: f32[10,128], index: 2, kind: input, shape index: {}]
  %s3 = inlined_call_operand.vmem [shape: f32[1,128], index: 3, kind: input, shape index: {}]
  %s4 = inlined_call_operand.vmem [shape: bf16[32,128], index: 4, kind: input, shape index: {}]
  %s5 = inlined_call_operand.vmem [shape: f32[1,32], index: 5, kind: input, shape index: {}]
  %s6 = inlined_call_operand.hbm [shape: f32[1,32], index: 6, kind: input, shape index: {}]
  %s7 = inlined_call_operand.hbm [shape: f32[16,128], index: 7, kind: input, shape index: {}]
  %s8 = inlined_call_operand.hbm [shape: f32[16,128], index: 8, kind: input, shape index: {}]
  %s9 = inlined_call_operand.hbm [shape: f32[1,128], index: 9, kind: input, shape index: {}]
  %s10 = inlined_call_operand.hbm [shape: f32[8,128], index: 10, kind: input, shape index: {}]
  %s11 = inlined_call_operand.hbm [shape: f32[1,128], index: 11, kind: input, shape index: {}]
  %s12 = inlined_call_operand.hbm [shape: f32[8,128], index: 12, kind: output, shape index: {0}]
  %s13 = inlined_call_operand.vmem [shape: s32[8,1], index: 13, kind: output, shape index: {1}]
  %s14 = inlined_call_operand.hbm [shape: f32[1,1], index: 14, kind: output, shape index: {2}]
  %s15 = inlined_call_operand.hbm [shape: s32[1,1], index: 15, kind: output, shape index: {3}]
  %16 = xla_tuple %s12, %s13, %s14, %s15
  %s17 = sld [smem:[#allocation0]]
  $region114: #{_forward_impl.1} parent=0
    _
  %s19 = ssub.s32 1, %s17
  %s20 = scalar_select 0, %s19, %s17
  $region1: #{_forward_impl.1} parent=0
    #allocation6 [shape = 'u8[8192]{0}', space=vmem, size = 0x2000, scoped, tag = 'input window, operand 1, single buffered']
    #allocation7 [shape = 's32[1]{0}', space=sflag, size = 0x4, scoped, tag = 'scoped memory for _forward_impl.1']
    #allocation8 [shape = 's32[1]{0}', space=sflag, size = 0x4, scoped, tag = 'scoped memory for _forward_impl.1']
    #allocation9 [shape = 'u8[8192]{0}', space=vmem, size = 0x2000, scoped, tag = 'input window, operand 2, single buffered']
    #allocation10 [shape = 's32[1]{0}', space=sflag, size = 0x4, scoped, tag = 'scoped memory for _forward_impl.1']
    #allocation11 [shape = 'u8[512]{0}', space=vmem, size = 0x400, scoped, tag = 'input window, operand 6, single buffered']
    #allocation12 [shape = 'u8[8192]{0}', space=vmem, size = 0x2000, scoped, tag = 'input window, operand 7, single buffered']
    #allocation13 [shape = 's32[1]{0}', space=sflag, size = 0x4, scoped, tag = 'scoped memory for _forward_impl.1']
    #allocation14 [shape = 'u8[8192]{0}', space=vmem, size = 0x2000, scoped, tag = 'input window, operand 8, single buffered']
    #allocation15 [shape = 'u8[512]{0}', space=vmem, size = 0x400, scoped, tag = 'input window, operand 9, single buffered']
    #allocation16 [shape = 's32[1]{0}', space=sflag, size = 0x4, scoped, tag = 'scoped memory for _forward_impl.1']
    #allocation17 [shape = 'u8[4096]{0}', space=vmem, size = 0x1000, scoped, tag = 'input window, operand 10, single buffered']
    #allocation18 [shape = 'u8[512]{0}', space=vmem, size = 0x400, scoped, tag = 'input window, operand 11, single buffered']
    #allocation19 [shape = 's32[1]{0}', space=sflag, size = 0x4, scoped, tag = 'scoped memory for _forward_impl.1']
    #allocation20 [shape = 'u8[4096]{0}', space=vmem, size = 0x1000, scoped, tag = 'output window, operand 0, single buffered']
    #allocation21 [shape = 'u8[512]{0}', space=vmem, size = 0x400, scoped, tag = 'output window, operand 2, single buffered']
    #allocation22 [shape = 's32[1]{0}', space=sflag, size = 0x4, scoped, tag = 'scoped memory for _forward_impl.1']
    #allocation23 [shape = 'u8[512]{0}', space=vmem, size = 0x400, scoped, tag = 'output window, operand 3, single buffered']
    %21 = vsyncpa [#allocation7], 0
    %22 = vsyncpa [#allocation10], 0
    %23 = vsyncpa [#allocation13], 0
    %24 = vsyncpa [#allocation16], 0
    %25 = vsyncpa [#allocation19], 0
    %26 = vsyncpa [#allocation8], 0
    %27 = vsyncpa [#allocation22], 0
    // Predicated region
    $region2: #{_forward_impl.1} parent=1 // pred_check
      _
    $region3: #{_forward_impl.1} parent=1 // pred_check_branch
      %29 = sbr.rel (0) target = $region5
    $region4: #{_forward_impl.1} parent=1 // pred_region
      _
    $region5: #{_forward_impl.1} parent=1 // pred_fallthru
      _
    // Predicated region
    $region6: #{_forward_impl.1} parent=1 // pred_check
      _
    $region7: #{_forward_impl.1} parent=1 // pred_check_branch
      %31 = sbr.rel (0) target = $region9
    $region8: #{_forward_impl.1} parent=1 // pred_region
      %33 = vsyncadd [#allocation7], 0
      %s34 = sshll.u32 %s1, 4
      %s35 = int_to_ptr.hbm [resolvable:$true] %s34
      %s36 = sshll.u32 [#allocation6], 4
      %s37 = int_to_ptr.vmem [resolvable:$true] %s36
      %42 = dma.hbm_to_vmem [thread:$0]  %s35, 256, %s37, [#allocation7], 128, 128, 8
    $region9: #{_forward_impl.1} parent=1 // pred_fallthru
      _
    // Predicated region
    $region10: #{_forward_impl.1} parent=1 // pred_check
      _
    $region11: #{_forward_impl.1} parent=1 // pred_check_branch
      %44 = sbr.rel (0) target = $region13
    $region12: #{_forward_impl.1} parent=1 // pred_region
      %46 = vsyncadd [#allocation10], 0
      %s47 = sshll.u32 %s2, 4
      %s48 = int_to_ptr.hbm [resolvable:$true] %s47
      %s49 = sshll.u32 [#allocation9], 4
      %s50 = int_to_ptr.vmem [resolvable:$true] %s49
      %55 = dma.hbm_to_vmem [thread:$0]  %s48, 256, %s50, [#allocation10], 128, 128, 8
    $region13: #{_forward_impl.1} parent=1 // pred_fallthru
      _
    // Predicated region
    $region14: #{_forward_impl.1} parent=1 // pred_check
      _
    $region15: #{_forward_impl.1} parent=1 // pred_check_branch
      %57 = sbr.rel (0) target = $region17
    $region16: #{_forward_impl.1} parent=1 // pred_region
      _
    $region17: #{_forward_impl.1} parent=1 // pred_fallthru
      _
    // Predicated region
    $region18: #{_forward_impl.1} parent=1 // pred_check
      _
    $region19: #{_forward_impl.1} parent=1 // pred_check_branch
      %59 = sbr.rel (0) target = $region21
    $region20: #{_forward_impl.1} parent=1 // pred_region
      _
    $region21: #{_forward_impl.1} parent=1 // pred_fallthru
      _
    // Predicated region
    $region22: #{_forward_impl.1} parent=1 // pred_check
      _
    $region23: #{_forward_impl.1} parent=1 // pred_check_branch
      %61 = sbr.rel (0) target = $region25
    $region24: #{_forward_impl.1} parent=1 // pred_region
      _
    $region25: #{_forward_impl.1} parent=1 // pred_fallthru
      _
    // Predicated region
    $region26: #{_forward_impl.1} parent=1 // pred_check
      _
    $region27: #{_forward_impl.1} parent=1 // pred_check_branch
      %63 = sbr.rel (0) target = $region29
    $region28: #{_forward_impl.1} parent=1 // pred_region
      %65 = vsyncadd [#allocation10], 0
      %s67 = sshll.u32 %s6, 4
      %s68 = int_to_ptr.hbm [resolvable:$true] %s67
      %s69 = sshll.u32 [#allocation11], 4
      %s70 = int_to_ptr.vmem [resolvable:$true] %s69
      %72 = dma.hbm_to_vmem [thread:$0]  %s68, 16, %s70, [#allocation10]
    $region29: #{_forward_impl.1} parent=1 // pred_fallthru
      _
    // Predicated region
    $region30: #{_forward_impl.1} parent=1 // pred_check
      _
    $region31: #{_forward_impl.1} parent=1 // pred_check_branch
      %74 = sbr.rel (0) target = $region33
    $region32: #{_forward_impl.1} parent=1 // pred_region
      %76 = vsyncadd [#allocation13], 0
      %s77 = sshll.u32 %s7, 4
      %s78 = int_to_ptr.hbm [resolvable:$true] %s77
      %s79 = sshll.u32 [#allocation12], 4
      %s80 = int_to_ptr.vmem [resolvable:$true] %s79
      %85 = dma.hbm_to_vmem [thread:$0]  %s78, 256, %s80, [#allocation13], 128, 128, 8
    $region33: #{_forward_impl.1} parent=1 // pred_fallthru
      _
    // Predicated region
    $region34: #{_forward_impl.1} parent=1 // pred_check
      _
    $region35: #{_forward_impl.1} parent=1 // pred_check_branch
      %87 = sbr.rel (0) target = $region37
    $region36: #{_forward_impl.1} parent=1 // pred_region
      %89 = vsyncadd [#allocation13], 0
      %s90 = sshll.u32 %s8, 4
      %s91 = int_to_ptr.hbm [resolvable:$true] %s90
      %s92 = sshll.u32 [#allocation14], 4
      %s93 = int_to_ptr.vmem [resolvable:$true] %s92
      %98 = dma.hbm_to_vmem [thread:$0]  %s91, 256, %s93, [#allocation13], 128, 128, 8
    $region37: #{_forward_impl.1} parent=1 // pred_fallthru
      _
    // Predicated region
    $region38: #{_forward_impl.1} parent=1 // pred_check
      _
    $region39: #{_forward_impl.1} parent=1 // pred_check_branch
      %100 = sbr.rel (0) target = $region41
    $region40: #{_forward_impl.1} parent=1 // pred_region
      %102 = vsyncadd [#allocation16], 0
      %s104 = sshll.u32 %s9, 4
      %s105 = int_to_ptr.hbm [resolvable:$true] %s104
      %s106 = sshll.u32 [#allocation15], 4
      %s107 = int_to_ptr.vmem [resolvable:$true] %s106
      %109 = dma.hbm_to_vmem [thread:$0]  %s105, 16, %s107, [#allocation16]
    $region41: #{_forward_impl.1} parent=1 // pred_fallthru
      _
    // Predicated region
    $region42: #{_forward_impl.1} parent=1 // pred_check
      _
    $region43: #{_forward_impl.1} parent=1 // pred_check_branch
      %111 = sbr.rel (0) target = $region45
    $region44: #{_forward_impl.1} parent=1 // pred_region
      %113 = vsyncadd [#allocation16], 0
      %s115 = sshll.u32 %s10, 4
      %s116 = int_to_ptr.hbm [resolvable:$true] %s115
      %s117 = sshll.u32 [#allocation17], 4
      %s118 = int_to_ptr.vmem [resolvable:$true] %s117
      %120 = dma.hbm_to_vmem [thread:$0]  %s116, 128, %s118, [#allocation16]
    $region45: #{_forward_impl.1} parent=1 // pred_fallthru
      _
    // Predicated region
    $region46: #{_forward_impl.1} parent=1 // pred_check
      _
    $region47: #{_forward_impl.1} parent=1 // pred_check_branch
      %122 = sbr.rel (0) target = $region49
    $region48: #{_forward_impl.1} parent=1 // pred_region
      %124 = vsyncadd [#allocation19], 0
      %s126 = sshll.u32 %s11, 4
      %s127 = int_to_ptr.hbm [resolvable:$true] %s126
      %s128 = sshll.u32 [#allocation18], 4
      %s129 = int_to_ptr.vmem [resolvable:$true] %s128
      %131 = dma.hbm_to_vmem [thread:$0]  %s127, 16, %s129, [#allocation19]
    $region49: #{_forward_impl.1} parent=1 // pred_fallthru
      _
    // Predicated region
    $region50: #{_forward_impl.1} parent=1 // pred_check
      _
    $region51: #{_forward_impl.1} parent=1 // pred_check_branch
      %133 = sbr.rel (0) target = $region53
    $region52: #{_forward_impl.1} parent=1 // pred_region
      %135 = dma.done [#allocation7], 256
    $region53: #{_forward_impl.1} parent=1 // pred_fallthru
      _
    // Predicated region
    $region54: #{_forward_impl.1} parent=1 // pred_check
      _
    $region55: #{_forward_impl.1} parent=1 // pred_check_branch
      %137 = sbr.rel (0) target = $region57
    $region56: #{_forward_impl.1} parent=1 // pred_region
      %139 = dma.done [#allocation10], 256
    $region57: #{_forward_impl.1} parent=1 // pred_fallthru
      _
    // Predicated region
    $region58: #{_forward_impl.1} parent=1 // pred_check
      _
    $region59: #{_forward_impl.1} parent=1 // pred_check_branch
      %141 = sbr.rel (0) target = $region61
    $region60: #{_forward_impl.1} parent=1 // pred_region
      %143 = dma.done [#allocation10], 16
    $region61: #{_forward_impl.1} parent=1 // pred_fallthru
      _
    // Predicated region
    $region62: #{_forward_impl.1} parent=1 // pred_check
      _
    $region63: #{_forward_impl.1} parent=1 // pred_check_branch
      %145 = sbr.rel (0) target = $region65
    $region64: #{_forward_impl.1} parent=1 // pred_region
      %147 = dma.done [#allocation13], 256
    $region65: #{_forward_impl.1} parent=1 // pred_fallthru
      _
    // Predicated region
    $region66: #{_forward_impl.1} parent=1 // pred_check
      _
    $region67: #{_forward_impl.1} parent=1 // pred_check_branch
      %149 = sbr.rel (0) target = $region69
    $region68: #{_forward_impl.1} parent=1 // pred_region
      %151 = dma.done [#allocation13], 256
    $region69: #{_forward_impl.1} parent=1 // pred_fallthru
      _
    // Predicated region
    $region70: #{_forward_impl.1} parent=1 // pred_check
      _
    $region71: #{_forward_impl.1} parent=1 // pred_check_branch
      %153 = sbr.rel (0) target = $region73
    $region72: #{_forward_impl.1} parent=1 // pred_region
      %155 = dma.done [#allocation16], 16
    $region73: #{_forward_impl.1} parent=1 // pred_fallthru
      _
    // Predicated region
    $region74: #{_forward_impl.1} parent=1 // pred_check
      _
    $region75: #{_forward_impl.1} parent=1 // pred_check_branch
      %157 = sbr.rel (0) target = $region77
    $region76: #{_forward_impl.1} parent=1 // pred_region
      %159 = dma.done [#allocation16], 128
    $region77: #{_forward_impl.1} parent=1 // pred_fallthru
      _
    // Predicated region
    $region78: #{_forward_impl.1} parent=1 // pred_check
      _
    $region79: #{_forward_impl.1} parent=1 // pred_check_branch
      %161 = sbr.rel (0) target = $region81
    $region80: #{_forward_impl.1} parent=1 // pred_region
      %163 = dma.done [#allocation19], 16
    $region81: #{_forward_impl.1} parent=1 // pred_fallthru
      _
    %v165 = vld [vmem:[%s0] sm:$0xff]
    %v166 = vlaneseq
    %v167 = vand.u32 %v166, 127
    %168 = vset.pattern.permute.xlu0 0
    %169 = vperm.xlu0 %168, %v165
    %v170 = vpop.permute.xlu0 %169
    %vm171 = vcmp.eq.s32.totalorder %v170, %v167
    %v172 = vsel %vm171, 1, 0
    %v173 = vcvt.s32.f32 %v172
    %v174 = vlaneseq
    %v175 = vshrl.u32 %v174, 7
    %v176 = vadd.s32 %v175, %v167
    %vm177 = vcmp.eq.s32.totalorder %v176, 7
    %v178 = vsel %vm177, 1, 0
    %v179 = vcvt.s32.f32 %v178
    %v180 = vld [vmem:[#allocation6] sm:$0xff]
    %v181 = vld [vmem:[#allocation6 + $0x8] sm:$0x3]
    %v182 = vld [vmem:[#allocation9] sm:$0xff]
    %v183 = vld [vmem:[#allocation9 + $0x8] sm:$0x3]
    %vm184 = vcmask 80896
    %v186 = vsel %vm184, %v173, 0
    %vm188 = vcmask 1041408
    %v190 = vsel %vm188, %v183, 0
    %192 = vmatpush.msra.mxu0 0.0
    %193 = vmatpush.msra.mxu0 0.0
    %194 = vmatpush.msra.mxu0 0.0
    %195 = vmatpush.msra.mxu0 0.0
    %196 = vmatpush.msra.mxu0 0.0
    %197 = vmatpush.msra.mxu0 0.0
    %198 = vmatpush.msra.mxu0 0.0
    %199 = vmatpush.msra.mxu0 0.0
    %200 = vmatpush.msra.mxu0 0.0
    %201 = vmatpush.msra.mxu0 0.0
    %202 = vmatpush.msra.mxu0 0.0
    %203 = vmatpush.msra.mxu0 0.0
    %204 = vmatpush.msra.mxu0 0.0
    %205 = vmatpush.msra.mxu0 0.0
    %206 = vmatpush.msra.mxu0 %v190
    %207 = vmatpush.msra.mxu0 %v182
    %208 = vmatmul.f32.gmra.mxu0 %v186
    %v209 = vpop.f32.mrf.mxu0
    %v210 = vadd.f32 0.0, %v209
    %211 = vdwg.mxu0
    %vm212 = vcmask 64512
    %v214 = vsel %vm212, %v179, 0
    %216 = vmatpush.msra.mxu0 0.0
    %217 = vmatpush.msra.mxu0 0.0
    %218 = vmatpush.msra.mxu0 0.0
    %219 = vmatpush.msra.mxu0 0.0
    %220 = vmatpush.msra.mxu0 0.0
    %221 = vmatpush.msra.mxu0 0.0
    %222 = vmatpush.msra.mxu0 0.0
    %223 = vmatpush.msra.mxu0 0.0
    %224 = vmatpush.msra.mxu0 0.0
    %225 = vmatpush.msra.mxu0 0.0
    %226 = vmatpush.msra.mxu0 0.0
    %227 = vmatpush.msra.mxu0 0.0
    %228 = vmatpush.msra.mxu0 0.0
    %229 = vmatpush.msra.mxu0 0.0
    %230 = vmatpush.msra.mxu0 0.0
    %231 = vmatpush.msra.mxu0 %v210
    %232 = vmatmul.f32.gmra.mxu0 %v214
    %v233 = vpop.f32.mrf.mxu0
    %v234 = vadd.f32 0.0, %v233
    %235 = vdwg.mxu0
    %v237 = vsel %vm188, %v181, 0
    %239 = vmatpush.msra.mxu0 0.0
    %240 = vmatpush.msra.mxu0 0.0
    %241 = vmatpush.msra.mxu0 0.0
    %242 = vmatpush.msra.mxu0 0.0
    %243 = vmatpush.msra.mxu0 0.0
    %244 = vmatpush.msra.mxu0 0.0
    %245 = vmatpush.msra.mxu0 0.0
    %246 = vmatpush.msra.mxu0 0.0
    %247 = vmatpush.msra.mxu0 0.0
    %248 = vmatpush.msra.mxu0 0.0
    %249 = vmatpush.msra.mxu0 0.0
    %250 = vmatpush.msra.mxu0 0.0
    %251 = vmatpush.msra.mxu0 0.0
    %252 = vmatpush.msra.mxu0 0.0
    %253 = vmatpush.msra.mxu0 %v237
    %254 = vmatpush.msra.mxu0 %v180
    %255 = vmatmul.f32.gmra.mxu0 %v186
    %v256 = vpop.f32.mrf.mxu0
    %v257 = vadd.f32 %v234, %v256
    %258 = vdwg.mxu0
    %v259 = vld [vmem:[%s3] sm:$0x1]
    %v261 = vperm.slane %v259, 0
    %v263 = vadd.f32 %v257, %v261
    %264 = vst [vmem:[#allocation2] sm:$0xff] %v263
    %v265 = vld [vmem:[%s4] sm:$0xf]
    %v266 = vld [vmem:[%s4 + $0x4] sm:$0xf]
    %v267 = vld [vmem:[%s4 + $0x8] sm:$0xf]
    %v268 = vld [vmem:[%s4 + $0xc] sm:$0xf]
    %v269 = vld [vmem:[%s5] sm:$0x1]
    %v270 = vld [vmem:[#allocation11] sm:$0x1]
    %v271 = vld [vmem:[#allocation2] sm:$0x1]
    %v272 = vpack.c.bf16 %v269, %v269
    %v277 = vunpack.c.l.b16 %v265
    %v278 = vunpack.c.l.b16 %v266
    %v279 = vunpack.c.l.b16 %v267
    %v280 = vunpack.c.l.b16 %v268
    %v281 = vpack.c.b16 %v278, %v277
    %v282 = vpack.c.b16 %v280, %v279
    %vm285 = vcmask 261120
    %v287 = vsel %vm285, %v272, 0
    %289 = vmatpush.bf16.msra.mxu0 0
    %290 = vmatpush.bf16.msra.mxu0 0
    %291 = vmatpush.bf16.msra.mxu0 0
    %292 = vmatpush.bf16.msra.mxu0 0
    %293 = vmatpush.bf16.msra.mxu0 0
    %294 = vmatpush.bf16.msra.mxu0 0
    %295 = vmatpush.bf16.msra.mxu0 %v282
    %296 = vmatpush.bf16.msra.mxu0 %v281
    %297 = vmatmul.bf16.gmra.mxu0 %v287
    %v298 = vpop.f32.mrf.mxu0
    %v299 = vadd.f32 0.0, %v298
    %v300 = vpop.f32.mrf.mxu0
    %301 = vdwg.mxu0
    %v302 = vadd.f32 %v271, %v299
    %v303 = vsub.f32 0.0, %v302
    %v304 = vmul.f32 %v303, 1.442695
    %v305 = vpow.pop %v304
    %v306 = vadd.f32 %v305, 1.0
    %v307 = vrcp.pop %v306
    %v308 = vtanh.pop %v302
    %v310 = vperm.slane %v270, 0
    %311 = vrot.lane.b32.xlu0 %v310, 32
    %v312 = vpop.permute.xlu0 %311
    %v314 = vmul.f32 %v307, %v312
    %316 = vrot.lane.b32.xlu0 %v308, 64
    %v317 = vpop.permute.xlu0 %316
    %v319 = vmul.f32 %v307, %v317
    %321 = vrot.lane.b32.xlu0 %v319, 32
    %v322 = vpop.permute.xlu0 %321
    %v324 = vadd.f32 %v314, %v322
    %v325 = vtanh.pop %v324
    %327 = vrot.lane.b32.xlu0 %v325, 64
    %v328 = vpop.permute.xlu0 %327
    %v330 = vmul.f32 %v307, %v328
    %332 = vrot.lane.b32.xlu0 %v330, 32
    %v333 = vpop.permute.xlu0 %332
    %vm335 = vcmask 253952
    %336 = vst.msk [vmem:[#allocation3] sm:$0x1] %vm335, %v333
    %v337 = vld [vmem:[#allocation2 + $0x1] sm:$0x1]
    %v338 = vpack.c.bf16 %v330, %v330
    %340 = vrot.lane.b32.xlu0 %v338, 32
    %v341 = vpop.permute.xlu0 %340
    %v343 = vsel %vm285, %v341, 0
    %345 = vmatpush.bf16.msra.mxu0 0
    %346 = vmatpush.bf16.msra.mxu0 0
    %347 = vmatpush.bf16.msra.mxu0 0
    %348 = vmatpush.bf16.msra.mxu0 0
    %349 = vmatpush.bf16.msra.mxu0 0
    %350 = vmatpush.bf16.msra.mxu0 0
    %351 = vmatpush.bf16.msra.mxu0 %v282
    %352 = vmatpush.bf16.msra.mxu0 %v281
    %353 = vmatmul.bf16.gmra.mxu0 %v343
    %v354 = vpop.f32.mrf.mxu0
    %v355 = vadd.f32 0.0, %v354
    %v356 = vpop.f32.mrf.mxu0
    %357 = vdwg.mxu0
    %v358 = vadd.f32 %v337, %v355
    %v359 = vsub.f32 0.0, %v358
    %v360 = vmul.f32 %v359, 1.442695
    %v361 = vpow.pop %v360
    %v362 = vadd.f32 %v361, 1.0
    %v363 = vrcp.pop %v362
    %v364 = vtanh.pop %v358
    %v365 = vmul.f32 %v363, %v324
    %367 = vrot.lane.b32.xlu0 %v364, 64
    %v368 = vpop.permute.xlu0 %367
    %v370 = vmul.f32 %v363, %v368
    %372 = vrot.lane.b32.xlu0 %v370, 32
    %v373 = vpop.permute.xlu0 %372
    %v375 = vadd.f32 %v365, %v373
    %v376 = vtanh.pop %v375
    %378 = vrot.lane.b32.xlu0 %v376, 64
    %v379 = vpop.permute.xlu0 %378
    %v381 = vmul.f32 %v363, %v379
    %383 = vrot.lane.b32.xlu0 %v381, 32
    %v384 = vpop.permute.xlu0 %383
    %386 = vst.msk [vmem:[#allocation3 + $0x1] sm:$0x1] %vm335, %v384
    %v387 = vld [vmem:[#allocation2 + $0x2] sm:$0x1]
    %v388 = vpack.c.bf16 %v381, %v381
    %390 = vrot.lane.b32.xlu0 %v388, 32
    %v391 = vpop.permute.xlu0 %390
    %v393 = vsel %vm285, %v391, 0
    %395 = vmatpush.bf16.msra.mxu0 0
    %396 = vmatpush.bf16.msra.mxu0 0
    %397 = vmatpush.bf16.msra.mxu0 0
    %398 = vmatpush.bf16.msra.mxu0 0
    %399 = vmatpush.bf16.msra.mxu0 0
    %400 = vmatpush.bf16.msra.mxu0 0
    %401 = vmatpush.bf16.msra.mxu0 %v282
    %402 = vmatpush.bf16.msra.mxu0 %v281
    %403 = vmatmul.bf16.gmra.mxu0 %v393
    %v404 = vpop.f32.mrf.mxu0
    %v405 = vadd.f32 0.0, %v404
    %v406 = vpop.f32.mrf.mxu0
    %407 = vdwg.mxu0
    %v408 = vadd.f32 %v387, %v405
    %v409 = vsub.f32 0.0, %v408
    %v410 = vmul.f32 %v409, 1.442695
    %v411 = vpow.pop %v410
    %v412 = vadd.f32 %v411, 1.0
    %v413 = vrcp.pop %v412
    %v414 = vtanh.pop %v408
    %v415 = vmul.f32 %v413, %v375
    %417 = vrot.lane.b32.xlu0 %v414, 64
    %v418 = vpop.permute.xlu0 %417
    %v420 = vmul.f32 %v413, %v418
    %422 = vrot.lane.b32.xlu0 %v420, 32
    %v423 = vpop.permute.xlu0 %422
    %v425 = vadd.f32 %v415, %v423
    %v426 = vtanh.pop %v425
    %428 = vrot.lane.b32.xlu0 %v426, 64
    %v429 = vpop.permute.xlu0 %428
    %v431 = vmul.f32 %v413, %v429
    %433 = vrot.lane.b32.xlu0 %v431, 32
    %v434 = vpop.permute.xlu0 %433
    %436 = vst.msk [vmem:[#allocation3 + $0x2] sm:$0x1] %vm335, %v434
    %v437 = vld [vmem:[#allocation2 + $0x3] sm:$0x1]
    %v438 = vpack.c.bf16 %v431, %v431
    %440 = vrot.lane.b32.xlu0 %v438, 32
    %v441 = vpop.permute.xlu0 %440
    %v443 = vsel %vm285, %v441, 0
    %445 = vmatpush.bf16.msra.mxu0 0
    %446 = vmatpush.bf16.msra.mxu0 0
    %447 = vmatpush.bf16.msra.mxu0 0
    %448 = vmatpush.bf16.msra.mxu0 0
    %449 = vmatpush.bf16.msra.mxu0 0
    %450 = vmatpush.bf16.msra.mxu0 0
    %451 = vmatpush.bf16.msra.mxu0 %v282
    %452 = vmatpush.bf16.msra.mxu0 %v281
    %453 = vmatmul.bf16.gmra.mxu0 %v443
    %v454 = vpop.f32.mrf.mxu0
    %v455 = vadd.f32 0.0, %v454
    %v456 = vpop.f32.mrf.mxu0
    %457 = vdwg.mxu0
    %v458 = vadd.f32 %v437, %v455
    %v459 = vsub.f32 0.0, %v458
    %v460 = vmul.f32 %v459, 1.442695
    %v461 = vpow.pop %v460
    %v462 = vadd.f32 %v461, 1.0
    %v463 = vrcp.pop %v462
    %v464 = vtanh.pop %v458
    %v465 = vmul.f32 %v463, %v425
    %467 = vrot.lane.b32.xlu0 %v464, 64
    %v468 = vpop.permute.xlu0 %467
    %v470 = vmul.f32 %v463, %v468
    %472 = vrot.lane.b32.xlu0 %v470, 32
    %v473 = vpop.permute.xlu0 %472
    %v475 = vadd.f32 %v465, %v473
    %v476 = vtanh.pop %v475
    %478 = vrot.lane.b32.xlu0 %v476, 64
    %v479 = vpop.permute.xlu0 %478
    %v481 = vmul.f32 %v463, %v479
    %483 = vrot.lane.b32.xlu0 %v481, 32
    %v484 = vpop.permute.xlu0 %483
    %486 = vst.msk [vmem:[#allocation3 + $0x3] sm:$0x1] %vm335, %v484
    %v487 = vld [vmem:[#allocation2 + $0x4] sm:$0x1]
    %v488 = vpack.c.bf16 %v481, %v481
    %490 = vrot.lane.b32.xlu0 %v488, 32
    %v491 = vpop.permute.xlu0 %490
    %v493 = vsel %vm285, %v491, 0
    %495 = vmatpush.bf16.msra.mxu0 0
    %496 = vmatpush.bf16.msra.mxu0 0
    %497 = vmatpush.bf16.msra.mxu0 0
    %498 = vmatpush.bf16.msra.mxu0 0
    %499 = vmatpush.bf16.msra.mxu0 0
    %500 = vmatpush.bf16.msra.mxu0 0
    %501 = vmatpush.bf16.msra.mxu0 %v282
    %502 = vmatpush.bf16.msra.mxu0 %v281
    %503 = vmatmul.bf16.gmra.mxu0 %v493
    %v504 = vpop.f32.mrf.mxu0
    %v505 = vadd.f32 0.0, %v504
    %v506 = vpop.f32.mrf.mxu0
    %507 = vdwg.mxu0
    %v508 = vadd.f32 %v487, %v505
    %v509 = vsub.f32 0.0, %v508
    %v510 = vmul.f32 %v509, 1.442695
    %v511 = vpow.pop %v510
    %v512 = vadd.f32 %v511, 1.0
    %v513 = vrcp.pop %v512
    %v514 = vtanh.pop %v508
    %v515 = vmul.f32 %v513, %v475
    %517 = vrot.lane.b32.xlu0 %v514, 64
    %v518 = vpop.permute.xlu0 %517
    %v520 = vmul.f32 %v513, %v518
    %522 = vrot.lane.b32.xlu0 %v520, 32
    %v523 = vpop.permute.xlu0 %522
    %v525 = vadd.f32 %v515, %v523
    %v526 = vtanh.pop %v525
    %528 = vrot.lane.b32.xlu0 %v526, 64
    %v529 = vpop.permute.xlu0 %528
    %v531 = vmul.f32 %v513, %v529
    %533 = vrot.lane.b32.xlu0 %v531, 32
    %v534 = vpop.permute.xlu0 %533
    %536 = vst.msk [vmem:[#allocation3 + $0x4] sm:$0x1] %vm335, %v534
    %v537 = vld [vmem:[#allocation2 + $0x5] sm:$0x1]
    %v538 = vpack.c.bf16 %v531, %v531
    %540 = vrot.lane.b32.xlu0 %v538, 32
    %v541 = vpop.permute.xlu0 %540
    %v543 = vsel %vm285, %v541, 0
    %545 = vmatpush.bf16.msra.mxu0 0
    %546 = vmatpush.bf16.msra.mxu0 0
    %547 = vmatpush.bf16.msra.mxu0 0
    %548 = vmatpush.bf16.msra.mxu0 0
    %549 = vmatpush.bf16.msra.mxu0 0
    %550 = vmatpush.bf16.msra.mxu0 0
    %551 = vmatpush.bf16.msra.mxu0 %v282
    %552 = vmatpush.bf16.msra.mxu0 %v281
    %553 = vmatmul.bf16.gmra.mxu0 %v543
    %v554 = vpop.f32.mrf.mxu0
    %v555 = vadd.f32 0.0, %v554
    %v556 = vpop.f32.mrf.mxu0
    %557 = vdwg.mxu0
    %v558 = vadd.f32 %v537, %v555
    %v559 = vsub.f32 0.0, %v558
    %v560 = vmul.f32 %v559, 1.442695
    %v561 = vpow.pop %v560
    %v562 = vadd.f32 %v561, 1.0
    %v563 = vrcp.pop %v562
    %v564 = vtanh.pop %v558
    %v565 = vmul.f32 %v563, %v525
    %567 = vrot.lane.b32.xlu0 %v564, 64
    %v568 = vpop.permute.xlu0 %567
    %v570 = vmul.f32 %v563, %v568
    %572 = vrot.lane.b32.xlu0 %v570, 32
    %v573 = vpop.permute.xlu0 %572
    %v575 = vadd.f32 %v565, %v573
    %v576 = vtanh.pop %v575
    %578 = vrot.lane.b32.xlu0 %v576, 64
    %v579 = vpop.permute.xlu0 %578
    %v581 = vmul.f32 %v563, %v579
    %583 = vrot.lane.b32.xlu0 %v581, 32
    %v584 = vpop.permute.xlu0 %583
    %586 = vst.msk [vmem:[#allocation3 + $0x5] sm:$0x1] %vm335, %v584
    %v587 = vld [vmem:[#allocation2 + $0x6] sm:$0x1]
    %v588 = vpack.c.bf16 %v581, %v581
    %590 = vrot.lane.b32.xlu0 %v588, 32
    %v591 = vpop.permute.xlu0 %590
    %v593 = vsel %vm285, %v591, 0
    %595 = vmatpush.bf16.msra.mxu0 0
    %596 = vmatpush.bf16.msra.mxu0 0
    %597 = vmatpush.bf16.msra.mxu0 0
    %598 = vmatpush.bf16.msra.mxu0 0
    %599 = vmatpush.bf16.msra.mxu0 0
    %600 = vmatpush.bf16.msra.mxu0 0
    %601 = vmatpush.bf16.msra.mxu0 %v282
    %602 = vmatpush.bf16.msra.mxu0 %v281
    %603 = vmatmul.bf16.gmra.mxu0 %v593
    %v604 = vpop.f32.mrf.mxu0
    %v605 = vadd.f32 0.0, %v604
    %v606 = vpop.f32.mrf.mxu0
    %607 = vdwg.mxu0
    %v608 = vadd.f32 %v587, %v605
    %v609 = vsub.f32 0.0, %v608
    %v610 = vmul.f32 %v609, 1.442695
    %v611 = vpow.pop %v610
    %v612 = vadd.f32 %v611, 1.0
    %v613 = vrcp.pop %v612
    %v614 = vtanh.pop %v608
    %v615 = vmul.f32 %v613, %v575
    %617 = vrot.lane.b32.xlu0 %v614, 64
    %v618 = vpop.permute.xlu0 %617
    %v620 = vmul.f32 %v613, %v618
    %622 = vrot.lane.b32.xlu0 %v620, 32
    %v623 = vpop.permute.xlu0 %622
    %v625 = vadd.f32 %v615, %v623
    %v626 = vtanh.pop %v625
    %628 = vrot.lane.b32.xlu0 %v626, 64
    %v629 = vpop.permute.xlu0 %628
    %v631 = vmul.f32 %v613, %v629
    %633 = vrot.lane.b32.xlu0 %v631, 32
    %v634 = vpop.permute.xlu0 %633
    %636 = vst.msk [vmem:[#allocation3 + $0x6] sm:$0x1] %vm335, %v634
    %v637 = vld [vmem:[#allocation2 + $0x7] sm:$0x1]
    %v638 = vpack.c.bf16 %v631, %v631
    %640 = vrot.lane.b32.xlu0 %v638, 32
    %v641 = vpop.permute.xlu0 %640
    %v643 = vsel %vm285, %v641, 0
    %645 = vmatpush.bf16.msra.mxu0 0
    %646 = vmatpush.bf16.msra.mxu0 0
    %647 = vmatpush.bf16.msra.mxu0 0
    %648 = vmatpush.bf16.msra.mxu0 0
    %649 = vmatpush.bf16.msra.mxu0 0
    %650 = vmatpush.bf16.msra.mxu0 0
    %651 = vmatpush.bf16.msra.mxu0 %v282
    %652 = vmatpush.bf16.msra.mxu0 %v281
    %653 = vmatmul.bf16.gmra.mxu0 %v643
    %v654 = vpop.f32.mrf.mxu0
    %v655 = vadd.f32 0.0, %v654
    %v656 = vpop.f32.mrf.mxu0
    %657 = vdwg.mxu0
    %v658 = vadd.f32 %v637, %v655
    %v659 = vsub.f32 0.0, %v658
    %v660 = vmul.f32 %v659, 1.442695
    %v661 = vpow.pop %v660
    %v662 = vadd.f32 %v661, 1.0
    %v663 = vrcp.pop %v662
    %v664 = vtanh.pop %v658
    %v665 = vmul.f32 %v663, %v625
    %667 = vrot.lane.b32.xlu0 %v664, 64
    %v668 = vpop.permute.xlu0 %667
    %v670 = vmul.f32 %v663, %v668
    %672 = vrot.lane.b32.xlu0 %v670, 32
    %v673 = vpop.permute.xlu0 %672
    %v675 = vadd.f32 %v665, %v673
    %v676 = vtanh.pop %v675
    %678 = vrot.lane.b32.xlu0 %v676, 64
    %v679 = vpop.permute.xlu0 %678
    %v681 = vmul.f32 %v663, %v679
    %683 = vrot.lane.b32.xlu0 %v681, 32
    %v684 = vpop.permute.xlu0 %683
    %686 = vst.msk [vmem:[#allocation3 + $0x7] sm:$0x1] %vm335, %v684
    %v687 = vld [vmem:[#allocation3] sm:$0xff]
    %689 = vrot.lane.b32.xlu0 %v687, 112
    %v690 = vpop.permute.xlu0 %689
    %692 = vmatpush.msra.mxu0 0.0
    %693 = vmatpush.msra.mxu0 0.0
    %694 = vmatpush.msra.mxu0 0.0
    %695 = vmatpush.msra.mxu0 0.0
    %696 = vmatpush.msra.mxu0 0.0
    %697 = vmatpush.msra.mxu0 0.0
    %698 = vmatpush.msra.mxu0 0.0
    %699 = vmatpush.msra.mxu0 0.0
    %700 = vmatpush.msra.mxu0 0.0
    %701 = vmatpush.msra.mxu0 0.0
    %702 = vmatpush.msra.mxu0 0.0
    %703 = vmatpush.msra.mxu0 0.0
    %704 = vmatpush.msra.mxu0 0.0
    %705 = vmatpush.msra.mxu0 0.0
    %706 = vmatpush.msra.mxu0 0.0
    %707 = vmatpush.msra.mxu0 %v690
    %708 = vmatmul.f32.gmra.mxu0 %v214
    %v709 = vpop.f32.mrf.mxu0
    %v710 = vadd.f32 0.0, %v709
    %711 = vdwg.mxu0
    %v712 = vld [vmem:[#allocation12] sm:$0xff]
    %v713 = vld [vmem:[#allocation12 + $0x8] sm:$0xff]
    %v714 = vld [vmem:[#allocation14] sm:$0xff]
    %v715 = vld [vmem:[#allocation14 + $0x8] sm:$0xff]
    %vm716 = vcmask 130048
    %v718 = vsel %vm716, %v710, 0
    %720 = vmatpush.msra.mxu0 0.0
    %721 = vmatpush.msra.mxu0 0.0
    %722 = vmatpush.msra.mxu0 0.0
    %723 = vmatpush.msra.mxu0 0.0
    %724 = vmatpush.msra.mxu0 0.0
    %725 = vmatpush.msra.mxu0 0.0
    %726 = vmatpush.msra.mxu0 0.0
    %727 = vmatpush.msra.mxu0 0.0
    %728 = vmatpush.msra.mxu0 0.0
    %729 = vmatpush.msra.mxu0 0.0
    %730 = vmatpush.msra.mxu0 0.0
    %731 = vmatpush.msra.mxu0 0.0
    %732 = vmatpush.msra.mxu0 0.0
    %733 = vmatpush.msra.mxu0 0.0
    %734 = vmatpush.msra.mxu0 %v715
    %735 = vmatpush.msra.mxu0 %v714
    %736 = vmatmul.f32.gmra.mxu0 %v718
    %v737 = vpop.f32.mrf.mxu0
    %v738 = vadd.f32 0.0, %v737
    %739 = vdwg.mxu0
    %v740 = vsel %vm716, %v687, 0
    %742 = vmatpush.msra.mxu0 0.0
    %743 = vmatpush.msra.mxu0 0.0
    %744 = vmatpush.msra.mxu0 0.0
    %745 = vmatpush.msra.mxu0 0.0
    %746 = vmatpush.msra.mxu0 0.0
    %747 = vmatpush.msra.mxu0 0.0
    %748 = vmatpush.msra.mxu0 0.0
    %749 = vmatpush.msra.mxu0 0.0
    %750 = vmatpush.msra.mxu0 0.0
    %751 = vmatpush.msra.mxu0 0.0
    %752 = vmatpush.msra.mxu0 0.0
    %753 = vmatpush.msra.mxu0 0.0
    %754 = vmatpush.msra.mxu0 0.0
    %755 = vmatpush.msra.mxu0 0.0
    %756 = vmatpush.msra.mxu0 %v713
    %757 = vmatpush.msra.mxu0 %v712
    %758 = vmatmul.f32.gmra.mxu0 %v740
    %v759 = vpop.f32.mrf.mxu0
    %v760 = vadd.f32 %v738, %v759
    %761 = vdwg.mxu0
    %v762 = vld [vmem:[#allocation15] sm:$0x1]
    %v764 = vperm.slane %v762, 0
    %v766 = vadd.f32 %v760, %v764
    %767 = vst [vmem:[#allocation20] sm:$0xff] %v766
    %v768 = vld [vmem:[#allocation17] sm:$0xff]
    %v769 = vcvt.s32.f32 %v175
    %vm770 = vcmp.eq.s32.totalorder %v175, %v167
    %vm771 = vcmp.eq.s32.totalorder %v175, 3
    %v772 = vsel %vm771, 0.0, -10000.0
    %v773 = vcvt.s32.f32 %v167
    %v774 = vadd.f32 %v772, %v768
    %v775 = vrot.slane %v774, 4
    %v776 = vmax.f32 %v774, %v775
    %v777 = vrot.slane %v776, 2
    %v778 = vmax.f32 %v776, %v777
    %v779 = vrot.slane %v778, 1
    %v780 = vmax.f32 %v778, %v779
    %vm781 = vcmp.eq.f32.partialorder %v774, %v780
    %v782 = vsel %vm781, %v769, 8.0
    %v783 = vrot.slane %v782, 4
    %v784 = vmin.f32 %v782, %v783
    %v785 = vrot.slane %v784, 2
    %v786 = vmin.f32 %v784, %v785
    %v787 = vrot.slane %v786, 1
    %v788 = vmin.f32 %v786, %v787
    %789 = vst [vmem:[#allocation4] sm:$0x1] %v788
    %v790 = vld [vmem:[#allocation20] sm:$0x1]
    %v791 = vadd.f32 %v780, %v790
    %v792 = vperm.slane %v791, 0
    %v793 = vsel %vm770, %v792, 0.0
    %794 = vadd.xlane.f32.xlu0 %v793
    %v795 = vpop.xlane.xlu0 %794
    %v796 = vadd.f32 %v795, %v768
    %v797 = vrot.slane %v796, 4
    %v798 = vmax.f32 %v796, %v797
    %v799 = vrot.slane %v798, 2
    %v800 = vmax.f32 %v798, %v799
    %v801 = vrot.slane %v800, 1
    %v802 = vmax.f32 %v800, %v801
    %vm803 = vcmp.eq.f32.partialorder %v796, %v802
    %v804 = vsel %vm803, %v769, 8.0
    %v805 = vrot.slane %v804, 4
    %v806 = vmin.f32 %v804, %v805
    %v807 = vrot.slane %v806, 2
    %v808 = vmin.f32 %v806, %v807
    %v809 = vrot.slane %v808, 1
    %v810 = vmin.f32 %v808, %v809
    %811 = vst [vmem:[#allocation4 + $0x1] sm:$0x1] %v810
    %v812 = vld [vmem:[#allocation20 + $0x1] sm:$0x1]
    %v813 = vadd.f32 %v802, %v812
    %v814 = vperm.slane %v813, 0
    %v815 = vsel %vm770, %v814, 0.0
    %816 = vadd.xlane.f32.xlu0 %v815
    %v817 = vpop.xlane.xlu0 %816
    %v818 = vadd.f32 %v817, %v768
    %v819 = vrot.slane %v818, 4
    %v820 = vmax.f32 %v818, %v819
    %v821 = vrot.slane %v820, 2
    %v822 = vmax.f32 %v820, %v821
    %v823 = vrot.slane %v822, 1
    %v824 = vmax.f32 %v822, %v823
    %vm825 = vcmp.eq.f32.partialorder %v818, %v824
    %v826 = vsel %vm825, %v769, 8.0
    %v827 = vrot.slane %v826, 4
    %v828 = vmin.f32 %v826, %v827
    %v829 = vrot.slane %v828, 2
    %v830 = vmin.f32 %v828, %v829
    %v831 = vrot.slane %v830, 1
    %v832 = vmin.f32 %v830, %v831
    %833 = vst [vmem:[#allocation4 + $0x2] sm:$0x1] %v832
    %v834 = vld [vmem:[#allocation20 + $0x2] sm:$0x1]
    %v835 = vadd.f32 %v824, %v834
    %v836 = vperm.slane %v835, 0
    %v837 = vsel %vm770, %v836, 0.0
    %838 = vadd.xlane.f32.xlu0 %v837
    %v839 = vpop.xlane.xlu0 %838
    %v840 = vadd.f32 %v839, %v768
    %v841 = vrot.slane %v840, 4
    %v842 = vmax.f32 %v840, %v841
    %v843 = vrot.slane %v842, 2
    %v844 = vmax.f32 %v842, %v843
    %v845 = vrot.slane %v844, 1
    %v846 = vmax.f32 %v844, %v845
    %vm847 = vcmp.eq.f32.partialorder %v840, %v846
    %v848 = vsel %vm847, %v769, 8.0
    %v849 = vrot.slane %v848, 4
    %v850 = vmin.f32 %v848, %v849
    %v851 = vrot.slane %v850, 2
    %v852 = vmin.f32 %v850, %v851
    %v853 = vrot.slane %v852, 1
    %v854 = vmin.f32 %v852, %v853
    %855 = vst [vmem:[#allocation4 + $0x3] sm:$0x1] %v854
    %v856 = vld [vmem:[#allocation20 + $0x3] sm:$0x1]
    %v857 = vadd.f32 %v846, %v856
    %v858 = vperm.slane %v857, 0
    %v859 = vsel %vm770, %v858, 0.0
    %860 = vadd.xlane.f32.xlu0 %v859
    %v861 = vpop.xlane.xlu0 %860
    %v862 = vadd.f32 %v861, %v768
    %v863 = vrot.slane %v862, 4
    %v864 = vmax.f32 %v862, %v863
    %v865 = vrot.slane %v864, 2
    %v866 = vmax.f32 %v864, %v865
    %v867 = vrot.slane %v866, 1
    %v868 = vmax.f32 %v866, %v867
    %vm869 = vcmp.eq.f32.partialorder %v862, %v868
    %v870 = vsel %vm869, %v769, 8.0
    %v871 = vrot.slane %v870, 4
    %v872 = vmin.f32 %v870, %v871
    %v873 = vrot.slane %v872, 2
    %v874 = vmin.f32 %v872, %v873
    %v875 = vrot.slane %v874, 1
    %v876 = vmin.f32 %v874, %v875
    %877 = vst [vmem:[#allocation4 + $0x4] sm:$0x1] %v876
    %v878 = vld [vmem:[#allocation20 + $0x4] sm:$0x1]
    %v879 = vadd.f32 %v868, %v878
    %v880 = vperm.slane %v879, 0
    %v881 = vsel %vm770, %v880, 0.0
    %882 = vadd.xlane.f32.xlu0 %v881
    %v883 = vpop.xlane.xlu0 %882
    %v884 = vadd.f32 %v883, %v768
    %v885 = vrot.slane %v884, 4
    %v886 = vmax.f32 %v884, %v885
    %v887 = vrot.slane %v886, 2
    %v888 = vmax.f32 %v886, %v887
    %v889 = vrot.slane %v888, 1
    %v890 = vmax.f32 %v888, %v889
    %vm891 = vcmp.eq.f32.partialorder %v884, %v890
    %v892 = vsel %vm891, %v769, 8.0
    %v893 = vrot.slane %v892, 4
    %v894 = vmin.f32 %v892, %v893
    %v895 = vrot.slane %v894, 2
    %v896 = vmin.f32 %v894, %v895
    %v897 = vrot.slane %v896, 1
    %v898 = vmin.f32 %v896, %v897
    %899 = vst [vmem:[#allocation4 + $0x5] sm:$0x1] %v898
    %v900 = vld [vmem:[#allocation20 + $0x5] sm:$0x1]
    %v901 = vadd.f32 %v890, %v900
    %v902 = vperm.slane %v901, 0
    %v903 = vsel %vm770, %v902, 0.0
    %904 = vadd.xlane.f32.xlu0 %v903
    %v905 = vpop.xlane.xlu0 %904
    %v906 = vadd.f32 %v905, %v768
    %v907 = vrot.slane %v906, 4
    %v908 = vmax.f32 %v906, %v907
    %v909 = vrot.slane %v908, 2
    %v910 = vmax.f32 %v908, %v909
    %v911 = vrot.slane %v910, 1
    %v912 = vmax.f32 %v910, %v911
    %vm913 = vcmp.eq.f32.partialorder %v906, %v912
    %v914 = vsel %vm913, %v769, 8.0
    %v915 = vrot.slane %v914, 4
    %v916 = vmin.f32 %v914, %v915
    %v917 = vrot.slane %v916, 2
    %v918 = vmin.f32 %v916, %v917
    %v919 = vrot.slane %v918, 1
    %v920 = vmin.f32 %v918, %v919
    %921 = vst [vmem:[#allocation4 + $0x6] sm:$0x1] %v920
    %v922 = vld [vmem:[#allocation20 + $0x6] sm:$0x1]
    %v923 = vadd.f32 %v912, %v922
    %v924 = vperm.slane %v923, 0
    %v925 = vsel %vm770, %v924, 0.0
    %926 = vadd.xlane.f32.xlu0 %v925
    %v927 = vpop.xlane.xlu0 %926
    %v928 = vadd.f32 %v927, %v768
    %v929 = vrot.slane %v928, 4
    %v930 = vmax.f32 %v928, %v929
    %v931 = vrot.slane %v930, 2
    %v932 = vmax.f32 %v930, %v931
    %v933 = vrot.slane %v932, 1
    %v934 = vmax.f32 %v932, %v933
    %vm935 = vcmp.eq.f32.partialorder %v928, %v934
    %v936 = vsel %vm935, %v769, 8.0
    %v937 = vrot.slane %v936, 4
    %v938 = vmin.f32 %v936, %v937
    %v939 = vrot.slane %v938, 2
    %v940 = vmin.f32 %v938, %v939
    %v941 = vrot.slane %v940, 1
    %v942 = vmin.f32 %v940, %v941
    %943 = vst [vmem:[#allocation4 + $0x7] sm:$0x1] %v942
    %v944 = vld [vmem:[#allocation20 + $0x7] sm:$0x1]
    %v945 = vadd.f32 %v934, %v944
    %v946 = vld [vmem:[#allocation18] sm:$0x1]
    %v947 = vadd.f32 %v945, %v946
    %vm948 = vcmask 1040384
    %v949 = vsel %vm948, %v947, -inf
    %950 = vmax.xlane.f32.xlu0 %v949
    %v951 = vpop.xlane.xlu0 %950
    %vm952 = vcmp.eq.f32.partialorder %v947, %v951
    %v953 = vsel %vm952, %v773, 128.0
    %v954 = vsel %vm948, %v953, inf
    %955 = vmin.xlane.f32.xlu0 %v954
    %v956 = vpop.xlane.xlu0 %955
    %vm957 = vcmask 0
    %958 = vst.msk [vmem:[#allocation21] sm:$0x1] %vm957, %v951
    %vm959 = vcmp.eq.f32.partialorder %v773, %v956
    %v960 = vsel %vm959, 1, 0
    %v961 = vcvt.s32.f32 %v960
    %962 = vst [vmem:[#allocation5 + $0x7] sm:$0x1] %v961
    %v963 = vld [vmem:[#allocation4 + $0x7] sm:$0x1]
    %v964 = vmul.f32 %v961, %v963
    %v965 = vsel %vm948, %v964, 0.0
    %966 = vadd.xlane.f32.xlu0 %v965
    %v967 = vpop.xlane.xlu0 %966
    %vm968 = vcmp.eq.f32.partialorder %v773, %v967
    %v969 = vsel %vm968, 1, 0
    %v970 = vcvt.s32.f32 %v969
    %971 = vst [vmem:[#allocation5 + $0x6] sm:$0x1] %v970
    %v972 = vld [vmem:[#allocation4 + $0x6] sm:$0x1]
    %v973 = vmul.f32 %v970, %v972
    %v974 = vsel %vm948, %v973, 0.0
    %975 = vadd.xlane.f32.xlu0 %v974
    %v976 = vpop.xlane.xlu0 %975
    %vm977 = vcmp.eq.f32.partialorder %v773, %v976
    %v978 = vsel %vm977, 1, 0
    %v979 = vcvt.s32.f32 %v978
    %980 = vst [vmem:[#allocation5 + $0x5] sm:$0x1] %v979
    %v981 = vld [vmem:[#allocation4 + $0x5] sm:$0x1]
    %v982 = vmul.f32 %v979, %v981
    %v983 = vsel %vm948, %v982, 0.0
    %984 = vadd.xlane.f32.xlu0 %v983
    %v985 = vpop.xlane.xlu0 %984
    %vm986 = vcmp.eq.f32.partialorder %v773, %v985
    %v987 = vsel %vm986, 1, 0
    %v988 = vcvt.s32.f32 %v987
    %989 = vst [vmem:[#allocation5 + $0x4] sm:$0x1] %v988
    %v990 = vld [vmem:[#allocation4 + $0x4] sm:$0x1]
    %v991 = vmul.f32 %v988, %v990
    %v992 = vsel %vm948, %v991, 0.0
    %993 = vadd.xlane.f32.xlu0 %v992
    %v994 = vpop.xlane.xlu0 %993
    %vm995 = vcmp.eq.f32.partialorder %v773, %v994
    %v996 = vsel %vm995, 1, 0
    %v997 = vcvt.s32.f32 %v996
    %998 = vst [vmem:[#allocation5 + $0x3] sm:$0x1] %v997
    %v999 = vld [vmem:[#allocation4 + $0x3] sm:$0x1]
    %v1000 = vmul.f32 %v997, %v999
    %v1001 = vsel %vm948, %v1000, 0.0
    %1002 = vadd.xlane.f32.xlu0 %v1001
    %v1003 = vpop.xlane.xlu0 %1002
    %vm1004 = vcmp.eq.f32.partialorder %v773, %v1003
    %v1005 = vsel %vm1004, 1, 0
    %v1006 = vcvt.s32.f32 %v1005
    %1007 = vst [vmem:[#allocation5 + $0x2] sm:$0x1] %v1006
    %v1008 = vld [vmem:[#allocation4 + $0x2] sm:$0x1]
    %v1009 = vmul.f32 %v1006, %v1008
    %v1010 = vsel %vm948, %v1009, 0.0
    %1011 = vadd.xlane.f32.xlu0 %v1010
    %v1012 = vpop.xlane.xlu0 %1011
    %vm1013 = vcmp.eq.f32.partialorder %v773, %v1012
    %v1014 = vsel %vm1013, 1, 0
    %v1015 = vcvt.s32.f32 %v1014
    %1016 = vst [vmem:[#allocation5 + $0x1] sm:$0x1] %v1015
    %v1017 = vld [vmem:[#allocation4 + $0x1] sm:$0x1]
    %v1018 = vmul.f32 %v1015, %v1017
    %v1019 = vsel %vm948, %v1018, 0.0
    %1020 = vadd.xlane.f32.xlu0 %v1019
    %v1021 = vpop.xlane.xlu0 %1020
    %vm1022 = vcmp.eq.f32.partialorder %v773, %v1021
    %v1023 = vsel %vm1022, 1, 0
    %v1024 = vcvt.s32.f32 %v1023
    %1025 = vst [vmem:[#allocation5] sm:$0x1] %v1024
    %v1026 = vld [vmem:[#allocation4] sm:$0x1]
    %v1027 = vmul.f32 %v1024, %v1026
    %v1028 = vsel %vm948, %v1027, 0.0
    %1029 = vadd.xlane.f32.xlu0 %v1028
    %v1030 = vpop.xlane.xlu0 %1029
    %v1031 = vcvt.f32.s32.to.zero.pseudo %v1030
    %1032 = vst.msk [vmem:[#allocation23] sm:$0x1] %vm957, %v1031
    %v1033 = vld [vmem:[#allocation5] sm:$0xff]
    %v1034 = vmul.f32 %v1033, %v773
    %1035 = vadd.xlane.f32.xlu0 %v1034
    %v1036 = vpop.xlane.xlu0 %1035
    %v1037 = vcvt.f32.s32.to.zero.pseudo %v1036
    %vm1038 = vcmask 7168
    %1039 = vst.msk [vmem:[%s13] sm:$0xff] %vm1038, %v1037
    // Predicated region
    $region82: #{_forward_impl.1} parent=1 // pred_check
      _
    $region83: #{_forward_impl.1} parent=1 // pred_check_branch
      %1041 = sbr.rel (0) target = $region85
    $region84: #{_forward_impl.1} parent=1 // pred_region
      %1043 = vsyncadd [#allocation8], 0
      %s1045 = sshll.u32 [#allocation20], 4
      %s1046 = int_to_ptr.vmem [resolvable:$true] %s1045
      %s1047 = sshll.u32 %s12, 4
      %s1048 = int_to_ptr.hbm [resolvable:$true] %s1047
      %1050 = dma.vmem_to_hbm [thread:$0]  %s1046, 128, %s1048, [#allocation8]
    $region85: #{_forward_impl.1} parent=1 // pred_fallthru
      _
    // Predicated region
    $region86: #{_forward_impl.1} parent=1 // pred_check
      _
    $region87: #{_forward_impl.1} parent=1 // pred_check_branch
      %1052 = sbr.rel (0) target = $region89
    $region88: #{_forward_impl.1} parent=1 // pred_region
      _
    $region89: #{_forward_impl.1} parent=1 // pred_fallthru
      _
    // Predicated region
    $region90: #{_forward_impl.1} parent=1 // pred_check
      _
    $region91: #{_forward_impl.1} parent=1 // pred_check_branch
      %1054 = sbr.rel (0) target = $region93
    $region92: #{_forward_impl.1} parent=1 // pred_region
      %1056 = vsyncadd [#allocation22], 0
      %s1058 = sshll.u32 [#allocation21], 4
      %s1059 = int_to_ptr.vmem [resolvable:$true] %s1058
      %s1060 = sshll.u32 %s14, 4
      %s1061 = int_to_ptr.hbm [resolvable:$true] %s1060
      %1063 = dma.vmem_to_hbm [thread:$0]  %s1059, 16, %s1061, [#allocation22]
    $region93: #{_forward_impl.1} parent=1 // pred_fallthru
      _
    // Predicated region
    $region94: #{_forward_impl.1} parent=1 // pred_check
      _
    $region95: #{_forward_impl.1} parent=1 // pred_check_branch
      %1065 = sbr.rel (0) target = $region97
    $region96: #{_forward_impl.1} parent=1 // pred_region
      %1067 = vsyncadd [#allocation22], 0
      %s1069 = sshll.u32 [#allocation23], 4
      %s1070 = int_to_ptr.vmem [resolvable:$true] %s1069
      %s1071 = sshll.u32 %s15, 4
      %s1072 = int_to_ptr.hbm [resolvable:$true] %s1071
      %1074 = dma.vmem_to_hbm [thread:$0]  %s1070, 16, %s1072, [#allocation22]
    $region97: #{_forward_impl.1} parent=1 // pred_fallthru
      _
    // Predicated region
    $region98: #{_forward_impl.1} parent=1 // pred_check
      _
    $region99: #{_forward_impl.1} parent=1 // pred_check_branch
      %1076 = sbr.rel (0) target = $region101
    $region100: #{_forward_impl.1} parent=1 // pred_region
      %1078 = dma.done [#allocation8], 128
    $region101: #{_forward_impl.1} parent=1 // pred_fallthru
      _
    // Predicated region
    $region102: #{_forward_impl.1} parent=1 // pred_check
      _
    $region103: #{_forward_impl.1} parent=1 // pred_check_branch
      %1080 = sbr.rel (0) target = $region105
    $region104: #{_forward_impl.1} parent=1 // pred_region
      _
    $region105: #{_forward_impl.1} parent=1 // pred_fallthru
      _
    // Predicated region
    $region106: #{_forward_impl.1} parent=1 // pred_check
      _
    $region107: #{_forward_impl.1} parent=1 // pred_check_branch
      %1082 = sbr.rel (0) target = $region109
    $region108: #{_forward_impl.1} parent=1 // pred_region
      %1084 = dma.done [#allocation22], 16
    $region109: #{_forward_impl.1} parent=1 // pred_fallthru
      _
    // Predicated region
    $region110: #{_forward_impl.1} parent=1 // pred_check
      _
    $region111: #{_forward_impl.1} parent=1 // pred_check_branch
      %1086 = sbr.rel (0) target = $region113
    $region112: #{_forward_impl.1} parent=1 // pred_region
      %1088 = dma.done [#allocation22], 16
    $region113: #{_forward_impl.1} parent=1 // pred_fallthru
      _
    %1089 = vsyncpa [#allocation7], 1
    %1090 = vsyncpa [#allocation10], 1
    %1091 = vsyncpa [#allocation13], 1
    %1092 = vsyncpa [#allocation16], 1
    %1093 = vsyncpa [#allocation19], 1
    %1094 = vsyncpa [#allocation8], 1
    %1095 = vsyncpa [#allocation22], 1

</llo_original>
